<compile_context>
chip_gen: v7x
topology: tpu7x:2x2x1
jax: 0.10.0
libtpu: 0.0.40
codegen_flags: <defaults>
</compile_context>

<pallas_src>
import jax
import jax.numpy as jnp
from jax import lax
from jax.experimental import pallas as pl
from jax.experimental.pallas import tpu as pltpu

MAIN_CATEGORY_DIM = 4
SUB_CATEGORY_DIM = 12
OUT_DIM = MAIN_CATEGORY_DIM + SUB_CATEGORY_DIM   # 16
ROWS_PER_LANE_BLOCK = 128 // OUT_DIM             # 8 output rows pack into 128 lanes


def _round_up(x, m):
    return (x + m - 1) // m * m


def _cat_key_kernel(ids_ref, thi_ref, tlo_ref, out_ref):
    """Gather + concat one tile of rows; lane-dense store.

    ids_ref : (TG, 16) int32  lanes [2r], [2r+1] = main id (clamped) / sub id (+vm)
                              of packed slot r (r = 0..7) of each output row group.
    thi_ref : (CV, 16) bf16   hi half of the combined table (VMEM-resident).
    tlo_ref : (CV, 16) bf16   lo half (f32 residual) of the combined table.
    out_ref : (TG, 128)       row-major repack of the (8*TG, 16) output rows.
    """
    tg = ids_ref.shape[0]
    cv = thi_ref.shape[0]

    # Hoisted out of the unrolled loop (JAX does not CSE broadcasts/iotas).
    lane = lax.broadcasted_iota(jnp.int32, (tg, cv), 1)
    thi = thi_ref[...]
    tlo = tlo_ref[...]

    for r in range(ROWS_PER_LANE_BLOCK):          # static unroll over the 8 lane groups
        mid = ids_ref[:, 2 * r:2 * r + 1]         # (TG, 1)
        sid = ids_ref[:, 2 * r + 1:2 * r + 2]     # (TG, 1), already offset by vocab_main
        onehot = ((lane == mid) | (lane == sid)).astype(jnp.bfloat16)
        grp = jnp.dot(onehot, thi, preferred_element_type=jnp.float32)
        grp = grp + jnp.dot(onehot, tlo, preferred_element_type=jnp.float32)
        out_ref[:, r * OUT_DIM:(r + 1) * OUT_DIM] = grp.astype(out_ref.dtype)


def _pick_tile_rows(n8, cv):
    """Rows per grid step: single tile for tiny inputs, else a multiple of 64."""
    # Cap the per-tile one-hot intermediates (bool masks + bf16 one-hots) to ~4 MiB.
    row_bytes = _round_up(cv, 128) * 6
    cap = (4 * 1024 * 1024) // row_bytes
    cap = max(64, min(1024, (cap // 64) * 64))
    if n8 <= 64:
        return n8                                  # single tile: blocks == full arrays
    tn = _round_up(-(-n8 // 2), 64)                # >= 2 grid steps (v7x: both TCs engage)
    return min(tn, cap)


def _vmem_limit_bytes(tn, cv, single_buffer_table):
    """Scoped-VMEM request from lane-padded, buffered block sizes."""
    tg = tn // ROWS_PER_LANE_BLOCK
    tbl = _round_up(cv, 8) * 128 * 2               # one bf16 table, last dim pads to 128
    tbl_bufs = 1 if single_buffer_table else 2
    ids_blk = tg * 128 * 4                         # (TG,16) int32, lane-padded
    out_blk = tg * 128 * 4                         # (TG,128) f32
    onehot = tn * _round_up(cv, 128) * 6           # masks + bf16 one-hots (worst case)
    misc = 8 * tg * 128 * 4                        # per-group f32 matmul results
    est = 2 * tbl_bufs * tbl + 2 * (ids_blk + out_blk) + onehot + misc
    try:
        phys = int(pltpu.get_tpu_info().vmem_capacity_bytes)
    except Exception:
        phys = 64 * 1024 * 1024                    # assume v7x (smallest VMEM) if unknown
    cap = phys * 3 // 4                            # ~48 MiB on v7x, ~96 MiB on v5e/v6e
    return int(min(cap, max(32 * 1024 * 1024, 2 * est)))


def make_category_key_encoder(main_table, sub_table):
    """Build an encode(main_ids, sub_ids) closure; table prep happens once here."""
    assert main_table.shape[1] == MAIN_CATEGORY_DIM
    assert sub_table.shape[1] == SUB_CATEGORY_DIM
    assert main_table.dtype == sub_table.dtype, "embedding tables must share a dtype"

    vm, vs = int(main_table.shape[0]), int(sub_table.shape[0])
    cv = vm + vs
    out_dtype = main_table.dtype

    # Combined table: main rows -> cols [0,4), sub rows -> cols [4,16).
    combined = jnp.zeros((cv, OUT_DIM), jnp.float32)
    combined = combined.at[:vm, :MAIN_CATEGORY_DIM].set(main_table.astype(jnp.float32))
    combined = combined.at[vm:, MAIN_CATEGORY_DIM:].set(sub_table.astype(jnp.float32))
    # hi/lo bf16 split: two DEFAULT-precision MXU passes recover ~16 mantissa bits.
    table_hi = combined.astype(jnp.bfloat16)
    table_lo = (combined - table_hi.astype(jnp.float32)).astype(jnp.bfloat16)

    def encode(main_category_id, sub_category_id):
        assert main_category_id.shape == sub_category_id.shape
        orig_shape = main_category_id.shape
        n = int(main_category_id.size)

        n8 = _round_up(max(n, 1), 8)
        tn = _pick_tile_rows(n8, cv)
        n_pad = _round_up(n8, tn)
        pad = n_pad - n
        tg = tn // ROWS_PER_LANE_BLOCK

        # Clamp ids (jnp.take semantics: OOB ids map to edge rows), merge main/sub
        # into one array, pad the tail (padded rows are computed and discarded).
        mids = jnp.clip(main_category_id.reshape(-1).astype(jnp.int32), 0, vm - 1)
        sids = jnp.clip(sub_category_id.reshape(-1).astype(jnp.int32), 0, vs - 1) + vm
        ids = jnp.stack([mids, sids], axis=-1)                   # (n, 2)
        if pad:
            ids = jnp.pad(ids, ((0, pad), (0, 0)))
        # Row-major repack: 8 consecutive (main, sub) pairs -> one 16-lane id row.
        ids_packed = ids.reshape(n_pad // ROWS_PER_LANE_BLOCK, 2 * ROWS_PER_LANE_BLOCK)

        grid = (n_pad // tn,)
        itemsize = jnp.dtype(out_dtype).itemsize
        cost = pl.CostEstimate(
            flops=4 * n_pad * cv * OUT_DIM,          # two bf16 matmul passes
            transcendentals=0,
            bytes_accessed=int(n_pad * (2 * 4 + OUT_DIM * itemsize)
                               + 2 * cv * OUT_DIM * 2),
        )

        def run(single_buffer_table):
            table_kwargs = {}
            if single_buffer_table:
                # Table index map is constant -> fetched once; single-buffer it.
                table_kwargs["pipeline_mode"] = pl.Buffered(1)
            table_spec = pl.BlockSpec((cv, OUT_DIM), lambda t: (0, 0), **table_kwargs)
            grid_spec = pltpu.PrefetchScalarGridSpec(
                num_scalar_prefetch=0,
                grid=grid,
                in_specs=[
                    pl.BlockSpec((tg, 2 * ROWS_PER_LANE_BLOCK), lambda t: (t, 0)),
                    table_spec,
                    table_spec,
                ],
                out_specs=pl.BlockSpec((tg, 128), lambda t: (t, 0)),
            )
            return pl.pallas_call(
                _cat_key_kernel,
                out_shape=jax.ShapeDtypeStruct(
                    (n_pad // ROWS_PER_LANE_BLOCK, 128), out_dtype),
                grid_spec=grid_spec,
                compiler_params=pltpu.CompilerParams(
                    dimension_semantics=("parallel",),   # independent tiles (v7x 2 TCs)
                    vmem_limit_bytes=_vmem_limit_bytes(tn, cv, single_buffer_table),
                ),
                cost_estimate=cost,
            )(ids_packed, table_hi, table_lo)

        try:
            out = run(True)
        except Exception:
            # Fall back to default double-buffering if Buffered(1) is unsupported.
            out = run(False)

        # Bitwise no-op repack (n_pad//8, 128) -> (n_pad, 16), drop padding.
        out = out.reshape(n_pad, OUT_DIM)[:n]
        return out.reshape(orig_shape + (OUT_DIM,))

    return encode


def category_key_encoder(main_table, sub_table, main_category_id, sub_category_id):
    """One-shot convenience wrapper (prefer make_category_key_encoder for reuse)."""
    return make_category_key_encoder(main_table, sub_table)(
        main_category_id, sub_category_id)


if __name__ == "__main__":
    # Deterministic parameter init (nn.Embedding default is N(0, 1)).
    main_cat_num = 10
    cat_num = 20
    batch, seq = 2, 8

    key = jax.random.PRNGKey(0)
    k_main, k_sub, k_mid, k_sid = jax.random.split(key, 4)

    main_table = jax.random.normal(k_main, (main_cat_num, MAIN_CATEGORY_DIM), jnp.float32)
    sub_table = jax.random.normal(k_sub, (cat_num, SUB_CATEGORY_DIM), jnp.float32)

    main_ids = jax.random.randint(k_mid, (batch, seq), 0, main_cat_num, jnp.int32)
    sub_ids = jax.random.randint(k_sid, (batch, seq), 0, cat_num, jnp.int32)

    encoder = make_category_key_encoder(main_table, sub_table)
    out = jax.block_until_ready(encoder(main_ids, sub_ids))

    # Reference check (plain JAX embedding lookup + concat).  Tolerance accounts
    # for the hi/lo bf16 table split (~2^-18 relative error on the gather).
    ref = jnp.concatenate(
        [jnp.take(main_table, main_ids, axis=0), jnp.take(sub_table, sub_ids, axis=0)],
        axis=-1,
    )
    assert out.shape == (batch, seq, OUT_DIM), out.shape
    assert jnp.allclose(out, ref, atol=1e-4, rtol=1e-4), "mismatch vs reference"

    print("KERNEL_OK")
</pallas_src>

<mosaic_0001>
module attributes {stable_mosaic.version = 11 : i64} {
  func.func @_cat_key_kernel(%arg0: i32, %arg1: memref<2x16xi32, #tpu.memory_space<vmem>>, %arg2: memref<30x16xbf16, #tpu.memory_space<vmem>>, %arg3: memref<30x16xbf16, #tpu.memory_space<vmem>>, %arg4: memref<2x128xf32, #tpu.memory_space<vmem>>) attributes {dimension_semantics = [#tpu.dimension_semantics<parallel>], iteration_bounds = array<i64: 1>, scalar_prefetch = 0 : i64, scratch_operands = 0 : i64, tpu.core_type = #tpu.core_type<tc>, window_params = [{transform_indices = @transform_0, window_bounds = array<i64: 2, 16>}, {pipeline_mode = #tpu.pipeline_mode<synchronous>, transform_indices = @transform_1, window_bounds = array<i64: 30, 16>}, {pipeline_mode = #tpu.pipeline_mode<synchronous>, transform_indices = @transform_2, window_bounds = array<i64: 30, 16>}, {transform_indices = @transform_3, window_bounds = array<i64: 2, 128>}]} {
    %0 = tpu.iota {dimensions = array<i32: 1>} : vector<2x30xi32>
    %c0 = arith.constant 0 : index
    %c0_0 = arith.constant 0 : index
    %1 = vector.load %arg2[%c0, %c0_0] : memref<30x16xbf16, #tpu.memory_space<vmem>>, vector<30x16xbf16>
    %c0_1 = arith.constant 0 : index
    %c0_2 = arith.constant 0 : index
    %2 = vector.load %arg3[%c0_1, %c0_2] : memref<30x16xbf16, #tpu.memory_space<vmem>>, vector<30x16xbf16>
    %c0_3 = arith.constant 0 : index
    %c0_4 = arith.constant 0 : index
    %3 = vector.load %arg1[%c0_3, %c0_4] : memref<2x16xi32, #tpu.memory_space<vmem>>, vector<2x1xi32>
    %c0_5 = arith.constant 0 : index
    %c1 = arith.constant 1 : index
    %4 = vector.load %arg1[%c0_5, %c1] : memref<2x16xi32, #tpu.memory_space<vmem>>, vector<2x1xi32>
    %5 = vector.broadcast %3 : vector<2x1xi32> to vector<2x30xi32>
    %6 = arith.cmpi eq, %0, %5 : vector<2x30xi32>
    %7 = vector.broadcast %4 : vector<2x1xi32> to vector<2x30xi32>
    %8 = arith.cmpi eq, %0, %7 : vector<2x30xi32>
    %9 = arith.ori %6, %8 : vector<2x30xi1>
    %10 = arith.extui %9 : vector<2x30xi1> to vector<2x30xi32>
    %11 = arith.sitofp %10 : vector<2x30xi32> to vector<2x30xf32>
    %12 = arith.truncf %11 : vector<2x30xf32> to vector<2x30xbf16>
    %cst = arith.constant dense<0.000000e+00> : vector<2x16xf32>
    %13 = tpu.matmul %12, %1, %cst {dimension_numbers = #tpu.dot_dimension_numbers<[1], [0], [0], [1], [0, 0, 1, 1], [], []>} : vector<2x30xbf16>, vector<30x16xbf16>, vector<2x16xf32> -> vector<2x16xf32>
    %cst_6 = arith.constant dense<0.000000e+00> : vector<2x16xf32>
    %14 = tpu.matmul %12, %2, %cst_6 {dimension_numbers = #tpu.dot_dimension_numbers<[1], [0], [0], [1], [0, 0, 1, 1], [], []>} : vector<2x30xbf16>, vector<30x16xbf16>, vector<2x16xf32> -> vector<2x16xf32>
    %15 = arith.addf %13, %14 : vector<2x16xf32>
    %c0_7 = arith.constant 0 : index
    %c0_8 = arith.constant 0 : index
    %16 = vector.load %arg4[%c0_7, %c0_8] : memref<2x128xf32, #tpu.memory_space<vmem>>, vector<2x16xf32>
    tpu.vector_store %arg4[%c0_7, %c0_8], %15 {strides = array<i32>} : memref<2x128xf32, #tpu.memory_space<vmem>>, vector<2x16xf32>,
    %c0_9 = arith.constant 0 : index
    %c2 = arith.constant 2 : index
    %17 = vector.load %arg1[%c0_9, %c2] : memref<2x16xi32, #tpu.memory_space<vmem>>, vector<2x1xi32>
    %c0_10 = arith.constant 0 : index
    %c3 = arith.constant 3 : index
    %18 = vector.load %arg1[%c0_10, %c3] : memref<2x16xi32, #tpu.memory_space<vmem>>, vector<2x1xi32>
    %19 = vector.broadcast %17 : vector<2x1xi32> to vector<2x30xi32>
    %20 = arith.cmpi eq, %0, %19 : vector<2x30xi32>
    %21 = vector.broadcast %18 : vector<2x1xi32> to vector<2x30xi32>
    %22 = arith.cmpi eq, %0, %21 : vector<2x30xi32>
    %23 = arith.ori %20, %22 : vector<2x30xi1>
    %24 = arith.extui %23 : vector<2x30xi1> to vector<2x30xi32>
    %25 = arith.sitofp %24 : vector<2x30xi32> to vector<2x30xf32>
    %26 = arith.truncf %25 : vector<2x30xf32> to vector<2x30xbf16>
    %cst_11 = arith.constant dense<0.000000e+00> : vector<2x16xf32>
    %27 = tpu.matmul %26, %1, %cst_11 {dimension_numbers = #tpu.dot_dimension_numbers<[1], [0], [0], [1], [0, 0, 1, 1], [], []>} : vector<2x30xbf16>, vector<30x16xbf16>, vector<2x16xf32> -> vector<2x16xf32>
    %cst_12 = arith.constant dense<0.000000e+00> : vector<2x16xf32>
    %28 = tpu.matmul %26, %2, %cst_12 {dimension_numbers = #tpu.dot_dimension_numbers<[1], [0], [0], [1], [0, 0, 1, 1], [], []>} : vector<2x30xbf16>, vector<30x16xbf16>, vector<2x16xf32> -> vector<2x16xf32>
    %29 = arith.addf %27, %28 : vector<2x16xf32>
    %c0_13 = arith.constant 0 : index
    %c16 = arith.constant 16 : index
    %30 = vector.load %arg4[%c0_13, %c16] : memref<2x128xf32, #tpu.memory_space<vmem>>, vector<2x16xf32>
    tpu.vector_store %arg4[%c0_13, %c16], %29 {strides = array<i32>} : memref<2x128xf32, #tpu.memory_space<vmem>>, vector<2x16xf32>,
    %c0_14 = arith.constant 0 : index
    %c4 = arith.constant 4 : index
    %31 = vector.load %arg1[%c0_14, %c4] : memref<2x16xi32, #tpu.memory_space<vmem>>, vector<2x1xi32>
    %c0_15 = arith.constant 0 : index
    %c5 = arith.constant 5 : index
    %32 = vector.load %arg1[%c0_15, %c5] : memref<2x16xi32, #tpu.memory_space<vmem>>, vector<2x1xi32>
    %33 = vector.broadcast %31 : vector<2x1xi32> to vector<2x30xi32>
    %34 = arith.cmpi eq, %0, %33 : vector<2x30xi32>
    %35 = vector.broadcast %32 : vector<2x1xi32> to vector<2x30xi32>
    %36 = arith.cmpi eq, %0, %35 : vector<2x30xi32>
    %37 = arith.ori %34, %36 : vector<2x30xi1>
    %38 = arith.extui %37 : vector<2x30xi1> to vector<2x30xi32>
    %39 = arith.sitofp %38 : vector<2x30xi32> to vector<2x30xf32>
    %40 = arith.truncf %39 : vector<2x30xf32> to vector<2x30xbf16>
    %cst_16 = arith.constant dense<0.000000e+00> : vector<2x16xf32>
    %41 = tpu.matmul %40, %1, %cst_16 {dimension_numbers = #tpu.dot_dimension_numbers<[1], [0], [0], [1], [0, 0, 1, 1], [], []>} : vector<2x30xbf16>, vector<30x16xbf16>, vector<2x16xf32> -> vector<2x16xf32>
    %cst_17 = arith.constant dense<0.000000e+00> : vector<2x16xf32>
    %42 = tpu.matmul %40, %2, %cst_17 {dimension_numbers = #tpu.dot_dimension_numbers<[1], [0], [0], [1], [0, 0, 1, 1], [], []>} : vector<2x30xbf16>, vector<30x16xbf16>, vector<2x16xf32> -> vector<2x16xf32>
    %43 = arith.addf %41, %42 : vector<2x16xf32>
    %c0_18 = arith.constant 0 : index
    %c32 = arith.constant 32 : index
    %44 = vector.load %arg4[%c0_18, %c32] : memref<2x128xf32, #tpu.memory_space<vmem>>, vector<2x16xf32>
    tpu.vector_store %arg4[%c0_18, %c32], %43 {strides = array<i32>} : memref<2x128xf32, #tpu.memory_space<vmem>>, vector<2x16xf32>,
    %c0_19 = arith.constant 0 : index
    %c6 = arith.constant 6 : index
    %45 = vector.load %arg1[%c0_19, %c6] : memref<2x16xi32, #tpu.memory_space<vmem>>, vector<2x1xi32>
    %c0_20 = arith.constant 0 : index
    %c7 = arith.constant 7 : index
    %46 = vector.load %arg1[%c0_20, %c7] : memref<2x16xi32, #tpu.memory_space<vmem>>, vector<2x1xi32>
    %47 = vector.broadcast %45 : vector<2x1xi32> to vector<2x30xi32>
    %48 = arith.cmpi eq, %0, %47 : vector<2x30xi32>
    %49 = vector.broadcast %46 : vector<2x1xi32> to vector<2x30xi32>
    %50 = arith.cmpi eq, %0, %49 : vector<2x30xi32>
    %51 = arith.ori %48, %50 : vector<2x30xi1>
    %52 = arith.extui %51 : vector<2x30xi1> to vector<2x30xi32>
    %53 = arith.sitofp %52 : vector<2x30xi32> to vector<2x30xf32>
    %54 = arith.truncf %53 : vector<2x30xf32> to vector<2x30xbf16>
    %cst_21 = arith.constant dense<0.000000e+00> : vector<2x16xf32>
    %55 = tpu.matmul %54, %1, %cst_21 {dimension_numbers = #tpu.dot_dimension_numbers<[1], [0], [0], [1], [0, 0, 1, 1], [], []>} : vector<2x30xbf16>, vector<30x16xbf16>, vector<2x16xf32> -> vector<2x16xf32>
    %cst_22 = arith.constant dense<0.000000e+00> : vector<2x16xf32>
    %56 = tpu.matmul %54, %2, %cst_22 {dimension_numbers = #tpu.dot_dimension_numbers<[1], [0], [0], [1], [0, 0, 1, 1], [], []>} : vector<2x30xbf16>, vector<30x16xbf16>, vector<2x16xf32> -> vector<2x16xf32>
    %57 = arith.addf %55, %56 : vector<2x16xf32>
    %c0_23 = arith.constant 0 : index
    %c48 = arith.constant 48 : index
    %58 = vector.load %arg4[%c0_23, %c48] : memref<2x128xf32, #tpu.memory_space<vmem>>, vector<2x16xf32>
    tpu.vector_store %arg4[%c0_23, %c48], %57 {strides = array<i32>} : memref<2x128xf32, #tpu.memory_space<vmem>>, vector<2x16xf32>,
    %c0_24 = arith.constant 0 : index
    %c8 = arith.constant 8 : index
    %59 = vector.load %arg1[%c0_24, %c8] : memref<2x16xi32, #tpu.memory_space<vmem>>, vector<2x1xi32>
    %c0_25 = arith.constant 0 : index
    %c9 = arith.constant 9 : index
    %60 = vector.load %arg1[%c0_25, %c9] : memref<2x16xi32, #tpu.memory_space<vmem>>, vector<2x1xi32>
    %61 = vector.broadcast %59 : vector<2x1xi32> to vector<2x30xi32>
    %62 = arith.cmpi eq, %0, %61 : vector<2x30xi32>
    %63 = vector.broadcast %60 : vector<2x1xi32> to vector<2x30xi32>
    %64 = arith.cmpi eq, %0, %63 : vector<2x30xi32>
    %65 = arith.ori %62, %64 : vector<2x30xi1>
    %66 = arith.extui %65 : vector<2x30xi1> to vector<2x30xi32>
    %67 = arith.sitofp %66 : vector<2x30xi32> to vector<2x30xf32>
    %68 = arith.truncf %67 : vector<2x30xf32> to vector<2x30xbf16>
    %cst_26 = arith.constant dense<0.000000e+00> : vector<2x16xf32>
    %69 = tpu.matmul %68, %1, %cst_26 {dimension_numbers = #tpu.dot_dimension_numbers<[1], [0], [0], [1], [0, 0, 1, 1], [], []>} : vector<2x30xbf16>, vector<30x16xbf16>, vector<2x16xf32> -> vector<2x16xf32>
    %cst_27 = arith.constant dense<0.000000e+00> : vector<2x16xf32>
    %70 = tpu.matmul %68, %2, %cst_27 {dimension_numbers = #tpu.dot_dimension_numbers<[1], [0], [0], [1], [0, 0, 1, 1], [], []>} : vector<2x30xbf16>, vector<30x16xbf16>, vector<2x16xf32> -> vector<2x16xf32>
    %71 = arith.addf %69, %70 : vector<2x16xf32>
    %c0_28 = arith.constant 0 : index
    %c64 = arith.constant 64 : index
    %72 = vector.load %arg4[%c0_28, %c64] : memref<2x128xf32, #tpu.memory_space<vmem>>, vector<2x16xf32>
    tpu.vector_store %arg4[%c0_28, %c64], %71 {strides = array<i32>} : memref<2x128xf32, #tpu.memory_space<vmem>>, vector<2x16xf32>,
    %c0_29 = arith.constant 0 : index
    %c10 = arith.constant 10 : index
    %73 = vector.load %arg1[%c0_29, %c10] : memref<2x16xi32, #tpu.memory_space<vmem>>, vector<2x1xi32>
    %c0_30 = arith.constant 0 : index
    %c11 = arith.constant 11 : index
    %74 = vector.load %arg1[%c0_30, %c11] : memref<2x16xi32, #tpu.memory_space<vmem>>, vector<2x1xi32>
    %75 = vector.broadcast %73 : vector<2x1xi32> to vector<2x30xi32>
    %76 = arith.cmpi eq, %0, %75 : vector<2x30xi32>
    %77 = vector.broadcast %74 : vector<2x1xi32> to vector<2x30xi32>
    %78 = arith.cmpi eq, %0, %77 : vector<2x30xi32>
    %79 = arith.ori %76, %78 : vector<2x30xi1>
    %80 = arith.extui %79 : vector<2x30xi1> to vector<2x30xi32>
    %81 = arith.sitofp %80 : vector<2x30xi32> to vector<2x30xf32>
    %82 = arith.truncf %81 : vector<2x30xf32> to vector<2x30xbf16>
    %cst_31 = arith.constant dense<0.000000e+00> : vector<2x16xf32>
    %83 = tpu.matmul %82, %1, %cst_31 {dimension_numbers = #tpu.dot_dimension_numbers<[1], [0], [0], [1], [0, 0, 1, 1], [], []>} : vector<2x30xbf16>, vector<30x16xbf16>, vector<2x16xf32> -> vector<2x16xf32>
    %cst_32 = arith.constant dense<0.000000e+00> : vector<2x16xf32>
    %84 = tpu.matmul %82, %2, %cst_32 {dimension_numbers = #tpu.dot_dimension_numbers<[1], [0], [0], [1], [0, 0, 1, 1], [], []>} : vector<2x30xbf16>, vector<30x16xbf16>, vector<2x16xf32> -> vector<2x16xf32>
    %85 = arith.addf %83, %84 : vector<2x16xf32>
    %c0_33 = arith.constant 0 : index
    %c80 = arith.constant 80 : index
    %86 = vector.load %arg4[%c0_33, %c80] : memref<2x128xf32, #tpu.memory_space<vmem>>, vector<2x16xf32>
    tpu.vector_store %arg4[%c0_33, %c80], %85 {strides = array<i32>} : memref<2x128xf32, #tpu.memory_space<vmem>>, vector<2x16xf32>,
    %c0_34 = arith.constant 0 : index
    %c12 = arith.constant 12 : index
    %87 = vector.load %arg1[%c0_34, %c12] : memref<2x16xi32, #tpu.memory_space<vmem>>, vector<2x1xi32>
    %c0_35 = arith.constant 0 : index
    %c13 = arith.constant 13 : index
    %88 = vector.load %arg1[%c0_35, %c13] : memref<2x16xi32, #tpu.memory_space<vmem>>, vector<2x1xi32>
    %89 = vector.broadcast %87 : vector<2x1xi32> to vector<2x30xi32>
    %90 = arith.cmpi eq, %0, %89 : vector<2x30xi32>
    %91 = vector.broadcast %88 : vector<2x1xi32> to vector<2x30xi32>
    %92 = arith.cmpi eq, %0, %91 : vector<2x30xi32>
    %93 = arith.ori %90, %92 : vector<2x30xi1>
    %94 = arith.extui %93 : vector<2x30xi1> to vector<2x30xi32>
    %95 = arith.sitofp %94 : vector<2x30xi32> to vector<2x30xf32>
    %96 = arith.truncf %95 : vector<2x30xf32> to vector<2x30xbf16>
    %cst_36 = arith.constant dense<0.000000e+00> : vector<2x16xf32>
    %97 = tpu.matmul %96, %1, %cst_36 {dimension_numbers = #tpu.dot_dimension_numbers<[1], [0], [0], [1], [0, 0, 1, 1], [], []>} : vector<2x30xbf16>, vector<30x16xbf16>, vector<2x16xf32> -> vector<2x16xf32>
    %cst_37 = arith.constant dense<0.000000e+00> : vector<2x16xf32>
    %98 = tpu.matmul %96, %2, %cst_37 {dimension_numbers = #tpu.dot_dimension_numbers<[1], [0], [0], [1], [0, 0, 1, 1], [], []>} : vector<2x30xbf16>, vector<30x16xbf16>, vector<2x16xf32> -> vector<2x16xf32>
    %99 = arith.addf %97, %98 : vector<2x16xf32>
    %c0_38 = arith.constant 0 : index
    %c96 = arith.constant 96 : index
    %100 = vector.load %arg4[%c0_38, %c96] : memref<2x128xf32, #tpu.memory_space<vmem>>, vector<2x16xf32>
    tpu.vector_store %arg4[%c0_38, %c96], %99 {strides = array<i32>} : memref<2x128xf32, #tpu.memory_space<vmem>>, vector<2x16xf32>,
    %c0_39 = arith.constant 0 : index
    %c14 = arith.constant 14 : index
    %101 = vector.load %arg1[%c0_39, %c14] : memref<2x16xi32, #tpu.memory_space<vmem>>, vector<2x1xi32>
    %c0_40 = arith.constant 0 : index
    %c15 = arith.constant 15 : index
    %102 = vector.load %arg1[%c0_40, %c15] : memref<2x16xi32, #tpu.memory_space<vmem>>, vector<2x1xi32>
    %103 = vector.broadcast %101 : vector<2x1xi32> to vector<2x30xi32>
    %104 = arith.cmpi eq, %0, %103 : vector<2x30xi32>
    %105 = vector.broadcast %102 : vector<2x1xi32> to vector<2x30xi32>
    %106 = arith.cmpi eq, %0, %105 : vector<2x30xi32>
    %107 = arith.ori %104, %106 : vector<2x30xi1>
    %108 = arith.extui %107 : vector<2x30xi1> to vector<2x30xi32>
    %109 = arith.sitofp %108 : vector<2x30xi32> to vector<2x30xf32>
    %110 = arith.truncf %109 : vector<2x30xf32> to vector<2x30xbf16>
    %cst_41 = arith.constant dense<0.000000e+00> : vector<2x16xf32>
    %111 = tpu.matmul %110, %1, %cst_41 {dimension_numbers = #tpu.dot_dimension_numbers<[1], [0], [0], [1], [0, 0, 1, 1], [], []>} : vector<2x30xbf16>, vector<30x16xbf16>, vector<2x16xf32> -> vector<2x16xf32>
    %cst_42 = arith.constant dense<0.000000e+00> : vector<2x16xf32>
    %112 = tpu.matmul %110, %2, %cst_42 {dimension_numbers = #tpu.dot_dimension_numbers<[1], [0], [0], [1], [0, 0, 1, 1], [], []>} : vector<2x30xbf16>, vector<30x16xbf16>, vector<2x16xf32> -> vector<2x16xf32>
    %113 = arith.addf %111, %112 : vector<2x16xf32>
    %c0_43 = arith.constant 0 : index
    %c112 = arith.constant 112 : index
    %114 = vector.load %arg4[%c0_43, %c112] : memref<2x128xf32, #tpu.memory_space<vmem>>, vector<2x16xf32>
    tpu.vector_store %arg4[%c0_43, %c112], %113 {strides = array<i32>} : memref<2x128xf32, #tpu.memory_space<vmem>>, vector<2x16xf32>,
    return
  }
  func.func @transform_0(%arg0: i32) -> (i32, i32) {
    %c0_i32 = arith.constant 0 : i32
    %c0_i32_0 = arith.constant 0 : i32
    return %arg0, %c0_i32 : i32, i32
  }
  func.func @transform_1(%arg0: i32) -> (i32, i32) {
    %c0_i32 = arith.constant 0 : i32
    %c0_i32_0 = arith.constant 0 : i32
    %c0_i32_1 = arith.constant 0 : i32
    return %c0_i32, %c0_i32_0 : i32, i32
  }
  func.func @transform_2(%arg0: i32) -> (i32, i32) {
    %c0_i32 = arith.constant 0 : i32
    %c0_i32_0 = arith.constant 0 : i32
    %c0_i32_1 = arith.constant 0 : i32
    return %c0_i32, %c0_i32_0 : i32, i32
  }
  func.func @transform_3(%arg0: i32) -> (i32, i32) {
    %c0_i32 = arith.constant 0 : i32
    %c0_i32_0 = arith.constant 0 : i32
    return %arg0, %c0_i32 : i32, i32
  }
}

module attributes {stable_mosaic.version = 11 : i64} {
  func.func @_cat_key_kernel(%arg0: i32, %arg1: memref<2x16xi32, #tpu.memory_space<vmem>>, %arg2: memref<30x16xbf16, #tpu.memory_space<vmem>>, %arg3: memref<30x16xbf16, #tpu.memory_space<vmem>>, %arg4: memref<2x128xf32, #tpu.memory_space<vmem>>) attributes {dimension_semantics = [#tpu.dimension_semantics<parallel>], iteration_bounds = array<i64: 1>, scalar_prefetch = 0 : i64, scratch_operands = 0 : i64, tpu.core_type = #tpu.core_type<tc>, window_params = [{transform_indices = @transform_0, window_bounds = array<i64: 2, 16>}, {pipeline_mode = #tpu.pipeline_mode<synchronous>, transform_indices = @transform_1, window_bounds = array<i64: 30, 16>}, {pipeline_mode = #tpu.pipeline_mode<synchronous>, transform_indices = @transform_2, window_bounds = array<i64: 30, 16>}, {transform_indices = @transform_3, window_bounds = array<i64: 2, 128>}]} {
    %0 = tpu.iota {dimensions = array<i32: 1>} : vector<2x30xi32>
    %c0 = arith.constant 0 : index
    %c0_0 = arith.constant 0 : index
    %1 = vector.load %arg2[%c0, %c0_0] : memref<30x16xbf16, #tpu.memory_space<vmem>>, vector<30x16xbf16>
    %c0_1 = arith.constant 0 : index
    %c0_2 = arith.constant 0 : index
    %2 = vector.load %arg3[%c0_1, %c0_2] : memref<30x16xbf16, #tpu.memory_space<vmem>>, vector<30x16xbf16>
    %c0_3 = arith.constant 0 : index
    %c0_4 = arith.constant 0 : index
    %3 = vector.load %arg1[%c0_3, %c0_4] : memref<2x16xi32, #tpu.memory_space<vmem>>, vector<2x1xi32>
    %c0_5 = arith.constant 0 : index
    %c1 = arith.constant 1 : index
    %4 = vector.load %arg1[%c0_5, %c1] : memref<2x16xi32, #tpu.memory_space<vmem>>, vector<2x1xi32>
    %5 = vector.broadcast %3 : vector<2x1xi32> to vector<2x30xi32>
    %6 = arith.cmpi eq, %0, %5 : vector<2x30xi32>
    %7 = vector.broadcast %4 : vector<2x1xi32> to vector<2x30xi32>
    %8 = arith.cmpi eq, %0, %7 : vector<2x30xi32>
    %9 = arith.ori %6, %8 : vector<2x30xi1>
    %10 = arith.extui %9 : vector<2x30xi1> to vector<2x30xi32>
    %11 = arith.sitofp %10 : vector<2x30xi32> to vector<2x30xf32>
    %12 = arith.truncf %11 : vector<2x30xf32> to vector<2x30xbf16>
    %cst = arith.constant dense<0.000000e+00> : vector<2x16xf32>
    %13 = tpu.matmul %12, %1, %cst {dimension_numbers = #tpu.dot_dimension_numbers<[1], [0], [0], [1], [0, 0, 1, 1], [], []>} : vector<2x30xbf16>, vector<30x16xbf16>, vector<2x16xf32> -> vector<2x16xf32>
    %cst_6 = arith.constant dense<0.000000e+00> : vector<2x16xf32>
    %14 = tpu.matmul %12, %2, %cst_6 {dimension_numbers = #tpu.dot_dimension_numbers<[1], [0], [0], [1], [0, 0, 1, 1], [], []>} : vector<2x30xbf16>, vector<30x16xbf16>, vector<2x16xf32> -> vector<2x16xf32>
    %15 = arith.addf %13, %14 : vector<2x16xf32>
    %c0_7 = arith.constant 0 : index
    %c0_8 = arith.constant 0 : index
    %16 = vector.load %arg4[%c0_7, %c0_8] : memref<2x128xf32, #tpu.memory_space<vmem>>, vector<2x16xf32>
    tpu.vector_store %arg4[%c0_7, %c0_8], %15 {strides = array<i32>} : memref<2x128xf32, #tpu.memory_space<vmem>>, vector<2x16xf32>,
    %c0_9 = arith.constant 0 : index
    %c2 = arith.constant 2 : index
    %17 = vector.load %arg1[%c0_9, %c2] : memref<2x16xi32, #tpu.memory_space<vmem>>, vector<2x1xi32>
    %c0_10 = arith.constant 0 : index
    %c3 = arith.constant 3 : index
    %18 = vector.load %arg1[%c0_10, %c3] : memref<2x16xi32, #tpu.memory_space<vmem>>, vector<2x1xi32>
    %19 = vector.broadcast %17 : vector<2x1xi32> to vector<2x30xi32>
    %20 = arith.cmpi eq, %0, %19 : vector<2x30xi32>
    %21 = vector.broadcast %18 : vector<2x1xi32> to vector<2x30xi32>
    %22 = arith.cmpi eq, %0, %21 : vector<2x30xi32>
    %23 = arith.ori %20, %22 : vector<2x30xi1>
    %24 = arith.extui %23 : vector<2x30xi1> to vector<2x30xi32>
    %25 = arith.sitofp %24 : vector<2x30xi32> to vector<2x30xf32>
    %26 = arith.truncf %25 : vector<2x30xf32> to vector<2x30xbf16>
    %cst_11 = arith.constant dense<0.000000e+00> : vector<2x16xf32>
    %27 = tpu.matmul %26, %1, %cst_11 {dimension_numbers = #tpu.dot_dimension_numbers<[1], [0], [0], [1], [0, 0, 1, 1], [], []>} : vector<2x30xbf16>, vector<30x16xbf16>, vector<2x16xf32> -> vector<2x16xf32>
    %cst_12 = arith.constant dense<0.000000e+00> : vector<2x16xf32>
    %28 = tpu.matmul %26, %2, %cst_12 {dimension_numbers = #tpu.dot_dimension_numbers<[1], [0], [0], [1], [0, 0, 1, 1], [], []>} : vector<2x30xbf16>, vector<30x16xbf16>, vector<2x16xf32> -> vector<2x16xf32>
    %29 = arith.addf %27, %28 : vector<2x16xf32>
    %c0_13 = arith.constant 0 : index
    %c16 = arith.constant 16 : index
    %30 = vector.load %arg4[%c0_13, %c16] : memref<2x128xf32, #tpu.memory_space<vmem>>, vector<2x16xf32>
    tpu.vector_store %arg4[%c0_13, %c16], %29 {strides = array<i32>} : memref<2x128xf32, #tpu.memory_space<vmem>>, vector<2x16xf32>,
    %c0_14 = arith.constant 0 : index
    %c4 = arith.constant 4 : index
    %31 = vector.load %arg1[%c0_14, %c4] : memref<2x16xi32, #tpu.memory_space<vmem>>, vector<2x1xi32>
    %c0_15 = arith.constant 0 : index
    %c5 = arith.constant 5 : index
    %32 = vector.load %arg1[%c0_15, %c5] : memref<2x16xi32, #tpu.memory_space<vmem>>, vector<2x1xi32>
    %33 = vector.broadcast %31 : vector<2x1xi32> to vector<2x30xi32>
    %34 = arith.cmpi eq, %0, %33 : vector<2x30xi32>
    %35 = vector.broadcast %32 : vector<2x1xi32> to vector<2x30xi32>
    %36 = arith.cmpi eq, %0, %35 : vector<2x30xi32>
    %37 = arith.ori %34, %36 : vector<2x30xi1>
    %38 = arith.extui %37 : vector<2x30xi1> to vector<2x30xi32>
    %39 = arith.sitofp %38 : vector<2x30xi32> to vector<2x30xf32>
    %40 = arith.truncf %39 : vector<2x30xf32> to vector<2x30xbf16>
    %cst_16 = arith.constant dense<0.000000e+00> : vector<2x16xf32>
    %41 = tpu.matmul %40, %1, %cst_16 {dimension_numbers = #tpu.dot_dimension_numbers<[1], [0], [0], [1], [0, 0, 1, 1], [], []>} : vector<2x30xbf16>, vector<30x16xbf16>, vector<2x16xf32> -> vector<2x16xf32>
    %cst_17 = arith.constant dense<0.000000e+00> : vector<2x16xf32>
    %42 = tpu.matmul %40, %2, %cst_17 {dimension_numbers = #tpu.dot_dimension_numbers<[1], [0], [0], [1], [0, 0, 1, 1], [], []>} : vector<2x30xbf16>, vector<30x16xbf16>, vector<2x16xf32> -> vector<2x16xf32>
    %43 = arith.addf %41, %42 : vector<2x16xf32>
    %c0_18 = arith.constant 0 : index
    %c32 = arith.constant 32 : index
    %44 = vector.load %arg4[%c0_18, %c32] : memref<2x128xf32, #tpu.memory_space<vmem>>, vector<2x16xf32>
    tpu.vector_store %arg4[%c0_18, %c32], %43 {strides = array<i32>} : memref<2x128xf32, #tpu.memory_space<vmem>>, vector<2x16xf32>,
    %c0_19 = arith.constant 0 : index
    %c6 = arith.constant 6 : index
    %45 = vector.load %arg1[%c0_19, %c6] : memref<2x16xi32, #tpu.memory_space<vmem>>, vector<2x1xi32>
    %c0_20 = arith.constant 0 : index
    %c7 = arith.constant 7 : index
    %46 = vector.load %arg1[%c0_20, %c7] : memref<2x16xi32, #tpu.memory_space<vmem>>, vector<2x1xi32>
    %47 = vector.broadcast %45 : vector<2x1xi32> to vector<2x30xi32>
    %48 = arith.cmpi eq, %0, %47 : vector<2x30xi32>
    %49 = vector.broadcast %46 : vector<2x1xi32> to vector<2x30xi32>
    %50 = arith.cmpi eq, %0, %49 : vector<2x30xi32>
    %51 = arith.ori %48, %50 : vector<2x30xi1>
    %52 = arith.extui %51 : vector<2x30xi1> to vector<2x30xi32>
    %53 = arith.sitofp %52 : vector<2x30xi32> to vector<2x30xf32>
    %54 = arith.truncf %53 : vector<2x30xf32> to vector<2x30xbf16>
    %cst_21 = arith.constant dense<0.000000e+00> : vector<2x16xf32>
    %55 = tpu.matmul %54, %1, %cst_21 {dimension_numbers = #tpu.dot_dimension_numbers<[1], [0], [0], [1], [0, 0, 1, 1], [], []>} : vector<2x30xbf16>, vector<30x16xbf16>, vector<2x16xf32> -> vector<2x16xf32>
    %cst_22 = arith.constant dense<0.000000e+00> : vector<2x16xf32>
    %56 = tpu.matmul %54, %2, %cst_22 {dimension_numbers = #tpu.dot_dimension_numbers<[1], [0], [0], [1], [0, 0, 1, 1], [], []>} : vector<2x30xbf16>, vector<30x16xbf16>, vector<2x16xf32> -> vector<2x16xf32>
    %57 = arith.addf %55, %56 : vector<2x16xf32>
    %c0_23 = arith.constant 0 : index
    %c48 = arith.constant 48 : index
    %58 = vector.load %arg4[%c0_23, %c48] : memref<2x128xf32, #tpu.memory_space<vmem>>, vector<2x16xf32>
    tpu.vector_store %arg4[%c0_23, %c48], %57 {strides = array<i32>} : memref<2x128xf32, #tpu.memory_space<vmem>>, vector<2x16xf32>,
    %c0_24 = arith.constant 0 : index
    %c8 = arith.constant 8 : index
    %59 = vector.load %arg1[%c0_24, %c8] : memref<2x16xi32, #tpu.memory_space<vmem>>, vector<2x1xi32>
    %c0_25 = arith.constant 0 : index
    %c9 = arith.constant 9 : index
    %60 = vector.load %arg1[%c0_25, %c9] : memref<2x16xi32, #tpu.memory_space<vmem>>, vector<2x1xi32>
    %61 = vector.broadcast %59 : vector<2x1xi32> to vector<2x30xi32>
    %62 = arith.cmpi eq, %0, %61 : vector<2x30xi32>
    %63 = vector.broadcast %60 : vector<2x1xi32> to vector<2x30xi32>
    %64 = arith.cmpi eq, %0, %63 : vector<2x30xi32>
    %65 = arith.ori %62, %64 : vector<2x30xi1>
    %66 = arith.extui %65 : vector<2x30xi1> to vector<2x30xi32>
    %67 = arith.sitofp %66 : vector<2x30xi32> to vector<2x30xf32>
    %68 = arith.truncf %67 : vector<2x30xf32> to vector<2x30xbf16>
    %cst_26 = arith.constant dense<0.000000e+00> : vector<2x16xf32>
    %69 = tpu.matmul %68, %1, %cst_26 {dimension_numbers = #tpu.dot_dimension_numbers<[1], [0], [0], [1], [0, 0, 1, 1], [], []>} : vector<2x30xbf16>, vector<30x16xbf16>, vector<2x16xf32> -> vector<2x16xf32>
    %cst_27 = arith.constant dense<0.000000e+00> : vector<2x16xf32>
    %70 = tpu.matmul %68, %2, %cst_27 {dimension_numbers = #tpu.dot_dimension_numbers<[1], [0], [0], [1], [0, 0, 1, 1], [], []>} : vector<2x30xbf16>, vector<30x16xbf16>, vector<2x16xf32> -> vector<2x16xf32>
    %71 = arith.addf %69, %70 : vector<2x16xf32>
    %c0_28 = arith.constant 0 : index
    %c64 = arith.constant 64 : index
    %72 = vector.load %arg4[%c0_28, %c64] : memref<2x128xf32, #tpu.memory_space<vmem>>, vector<2x16xf32>
    tpu.vector_store %arg4[%c0_28, %c64], %71 {strides = array<i32>} : memref<2x128xf32, #tpu.memory_space<vmem>>, vector<2x16xf32>,
    %c0_29 = arith.constant 0 : index
    %c10 = arith.constant 10 : index
    %73 = vector.load %arg1[%c0_29, %c10] : memref<2x16xi32, #tpu.memory_space<vmem>>, vector<2x1xi32>
    %c0_30 = arith.constant 0 : index
    %c11 = arith.constant 11 : index
    %74 = vector.load %arg1[%c0_30, %c11] : memref<2x16xi32, #tpu.memory_space<vmem>>, vector<2x1xi32>
    %75 = vector.broadcast %73 : vector<2x1xi32> to vector<2x30xi32>
    %76 = arith.cmpi eq, %0, %75 : vector<2x30xi32>
    %77 = vector.broadcast %74 : vector<2x1xi32> to vector<2x30xi32>
    %78 = arith.cmpi eq, %0, %77 : vector<2x30xi32>
    %79 = arith.ori %76, %78 : vector<2x30xi1>
    %80 = arith.extui %79 : vector<2x30xi1> to vector<2x30xi32>
    %81 = arith.sitofp %80 : vector<2x30xi32> to vector<2x30xf32>
    %82 = arith.truncf %81 : vector<2x30xf32> to vector<2x30xbf16>
    %cst_31 = arith.constant dense<0.000000e+00> : vector<2x16xf32>
    %83 = tpu.matmul %82, %1, %cst_31 {dimension_numbers = #tpu.dot_dimension_numbers<[1], [0], [0], [1], [0, 0, 1, 1], [], []>} : vector<2x30xbf16>, vector<30x16xbf16>, vector<2x16xf32> -> vector<2x16xf32>
    %cst_32 = arith.constant dense<0.000000e+00> : vector<2x16xf32>
    %84 = tpu.matmul %82, %2, %cst_32 {dimension_numbers = #tpu.dot_dimension_numbers<[1], [0], [0], [1], [0, 0, 1, 1], [], []>} : vector<2x30xbf16>, vector<30x16xbf16>, vector<2x16xf32> -> vector<2x16xf32>
    %85 = arith.addf %83, %84 : vector<2x16xf32>
    %c0_33 = arith.constant 0 : index
    %c80 = arith.constant 80 : index
    %86 = vector.load %arg4[%c0_33, %c80] : memref<2x128xf32, #tpu.memory_space<vmem>>, vector<2x16xf32>
    tpu.vector_store %arg4[%c0_33, %c80], %85 {strides = array<i32>} : memref<2x128xf32, #tpu.memory_space<vmem>>, vector<2x16xf32>,
    %c0_34 = arith.constant 0 : index
    %c12 = arith.constant 12 : index
    %87 = vector.load %arg1[%c0_34, %c12] : memref<2x16xi32, #tpu.memory_space<vmem>>, vector<2x1xi32>
    %c0_35 = arith.constant 0 : index
    %c13 = arith.constant 13 : index
    %88 = vector.load %arg1[%c0_35, %c13] : memref<2x16xi32, #tpu.memory_space<vmem>>, vector<2x1xi32>
    %89 = vector.broadcast %87 : vector<2x1xi32> to vector<2x30xi32>
    %90 = arith.cmpi eq, %0, %89 : vector<2x30xi32>
    %91 = vector.broadcast %88 : vector<2x1xi32> to vector<2x30xi32>
    %92 = arith.cmpi eq, %0, %91 : vector<2x30xi32>
    %93 = arith.ori %90, %92 : vector<2x30xi1>
    %94 = arith.extui %93 : vector<2x30xi1> to vector<2x30xi32>
    %95 = arith.sitofp %94 : vector<2x30xi32> to vector<2x30xf32>
    %96 = arith.truncf %95 : vector<2x30xf32> to vector<2x30xbf16>
    %cst_36 = arith.constant dense<0.000000e+00> : vector<2x16xf32>
    %97 = tpu.matmul %96, %1, %cst_36 {dimension_numbers = #tpu.dot_dimension_numbers<[1], [0], [0], [1], [0, 0, 1, 1], [], []>} : vector<2x30xbf16>, vector<30x16xbf16>, vector<2x16xf32> -> vector<2x16xf32>
    %cst_37 = arith.constant dense<0.000000e+00> : vector<2x16xf32>
    %98 = tpu.matmul %96, %2, %cst_37 {dimension_numbers = #tpu.dot_dimension_numbers<[1], [0], [0], [1], [0, 0, 1, 1], [], []>} : vector<2x30xbf16>, vector<30x16xbf16>, vector<2x16xf32> -> vector<2x16xf32>
    %99 = arith.addf %97, %98 : vector<2x16xf32>
    %c0_38 = arith.constant 0 : index
    %c96 = arith.constant 96 : index
    %100 = vector.load %arg4[%c0_38, %c96] : memref<2x128xf32, #tpu.memory_space<vmem>>, vector<2x16xf32>
    tpu.vector_store %arg4[%c0_38, %c96], %99 {strides = array<i32>} : memref<2x128xf32, #tpu.memory_space<vmem>>, vector<2x16xf32>,
    %c0_39 = arith.constant 0 : index
    %c14 = arith.constant 14 : index
    %101 = vector.load %arg1[%c0_39, %c14] : memref<2x16xi32, #tpu.memory_space<vmem>>, vector<2x1xi32>
    %c0_40 = arith.constant 0 : index
    %c15 = arith.constant 15 : index
    %102 = vector.load %arg1[%c0_40, %c15] : memref<2x16xi32, #tpu.memory_space<vmem>>, vector<2x1xi32>
    %103 = vector.broadcast %101 : vector<2x1xi32> to vector<2x30xi32>
    %104 = arith.cmpi eq, %0, %103 : vector<2x30xi32>
    %105 = vector.broadcast %102 : vector<2x1xi32> to vector<2x30xi32>
    %106 = arith.cmpi eq, %0, %105 : vector<2x30xi32>
    %107 = arith.ori %104, %106 : vector<2x30xi1>
    %108 = arith.extui %107 : vector<2x30xi1> to vector<2x30xi32>
    %109 = arith.sitofp %108 : vector<2x30xi32> to vector<2x30xf32>
    %110 = arith.truncf %109 : vector<2x30xf32> to vector<2x30xbf16>
    %cst_41 = arith.constant dense<0.000000e+00> : vector<2x16xf32>
    %111 = tpu.matmul %110, %1, %cst_41 {dimension_numbers = #tpu.dot_dimension_numbers<[1], [0], [0], [1], [0, 0, 1, 1], [], []>} : vector<2x30xbf16>, vector<30x16xbf16>, vector<2x16xf32> -> vector<2x16xf32>
    %cst_42 = arith.constant dense<0.000000e+00> : vector<2x16xf32>
    %112 = tpu.matmul %110, %2, %cst_42 {dimension_numbers = #tpu.dot_dimension_numbers<[1], [0], [0], [1], [0, 0, 1, 1], [], []>} : vector<2x30xbf16>, vector<30x16xbf16>, vector<2x16xf32> -> vector<2x16xf32>
    %113 = arith.addf %111, %112 : vector<2x16xf32>
    %c0_43 = arith.constant 0 : index
    %c112 = arith.constant 112 : index
    %114 = vector.load %arg4[%c0_43, %c112] : memref<2x128xf32, #tpu.memory_space<vmem>>, vector<2x16xf32>
    tpu.vector_store %arg4[%c0_43, %c112], %113 {strides = array<i32>} : memref<2x128xf32, #tpu.memory_space<vmem>>, vector<2x16xf32>,
    return
  }
  func.func @transform_0(%arg0: i32) -> (i32, i32) {
    %c0_i32 = arith.constant 0 : i32
    %c0_i32_0 = arith.constant 0 : i32
    return %arg0, %c0_i32 : i32, i32
  }
  func.func @transform_1(%arg0: i32) -> (i32, i32) {
    %c0_i32 = arith.constant 0 : i32
    %c0_i32_0 = arith.constant 0 : i32
    %c0_i32_1 = arith.constant 0 : i32
    return %c0_i32, %c0_i32_0 : i32, i32
  }
  func.func @transform_2(%arg0: i32) -> (i32, i32) {
    %c0_i32 = arith.constant 0 : i32
    %c0_i32_0 = arith.constant 0 : i32
    %c0_i32_1 = arith.constant 0 : i32
    return %c0_i32, %c0_i32_0 : i32, i32
  }
  func.func @transform_3(%arg0: i32) -> (i32, i32) {
    %c0_i32 = arith.constant 0 : i32
    %c0_i32_0 = arith.constant 0 : i32
    return %arg0, %c0_i32 : i32, i32
  }
}

</mosaic_0001>

<llo_original>
// kernel: tpu_custom_call.1
$region0: #{tpu_custom_call.1}
  #allocation0 [shape = 'u32[]', space=smem, size = 0x4, offset = 0x4, fixed_abs, tag = 'smem constant byte address 0x4 - core index']
  #allocation1 [shape = 'u32[144,128]{1,0:T(1,128)}', space=vmem, size = 0x12000, scoped, tag = 'internal scratch']
  %s0 = inlined_call_operand.vmem [shape: s32[2,16], index: 0, kind: input, shape index: {}]
  %s1 = inlined_call_operand.vmem [shape: bf16[30,16], index: 1, kind: input, shape index: {}]
  %s2 = inlined_call_operand.vmem [shape: bf16[30,16], index: 2, kind: input, shape index: {}]
  %s3 = inlined_call_operand.hbm [shape: f32[2,128], index: 3, kind: output, shape index: {}]
  %s4 = sld [smem:[#allocation0]]
  $region22: #{tpu_custom_call.1} parent=0
    _
  %s6 = ssub.s32 1, %s4
  %s7 = scalar_select 0, %s6, %s4
  $region1: #{tpu_custom_call.1} parent=0
    #allocation2 [shape = 'u8[1024]{0}', space=vmem, size = 0x400, scoped, tag = 'output window, operand 0, single buffered']
    #allocation3 [shape = 's32[1]{0}', space=sflag, size = 0x4, scoped, tag = 'scoped memory for tpu_custom_call.1']
    %8 = vsyncpa [#allocation3], 0
    // Predicated region
    $region2: #{tpu_custom_call.1} parent=1 // pred_check
      _
    $region3: #{tpu_custom_call.1} parent=1 // pred_check_branch
      %10 = sbr.rel (0) target = $region5
    $region4: #{tpu_custom_call.1} parent=1 // pred_region
      _
    $region5: #{tpu_custom_call.1} parent=1 // pred_fallthru
      _
    // Predicated region
    $region6: #{tpu_custom_call.1} parent=1 // pred_check
      _
    $region7: #{tpu_custom_call.1} parent=1 // pred_check_branch
      %12 = sbr.rel (0) target = $region9
    $region8: #{tpu_custom_call.1} parent=1 // pred_region
      _
    $region9: #{tpu_custom_call.1} parent=1 // pred_fallthru
      _
    // Predicated region
    $region10: #{tpu_custom_call.1} parent=1 // pred_check
      _
    $region11: #{tpu_custom_call.1} parent=1 // pred_check_branch
      %14 = sbr.rel (0) target = $region13
    $region12: #{tpu_custom_call.1} parent=1 // pred_region
      _
    $region13: #{tpu_custom_call.1} parent=1 // pred_fallthru
      _
    %v16 = vlaneseq
    %v17 = vand.u32 %v16, 127
    %v18 = vld [vmem:[%s1] sm:$0xf]
    %v19 = vld [vmem:[%s1 + $0x4] sm:$0xf]
    %v20 = vld [vmem:[%s1 + $0x8] sm:$0xf]
    %v21 = vld [vmem:[%s1 + $0xc] sm:$0x7]
    %v22 = vld [vmem:[%s2] sm:$0xf]
    %v23 = vld [vmem:[%s2 + $0x4] sm:$0xf]
    %v24 = vld [vmem:[%s2 + $0x8] sm:$0xf]
    %v25 = vld [vmem:[%s2 + $0xc] sm:$0x7]
    %v26 = vld [vmem:[%s0] sm:$0x3]
    %27 = vset.pattern.permute.xlu0 0
    %28 = vperm.xlu0 %27, %v26
    %v29 = vpop.permute.xlu0 %28
    %vm30 = vcmp.eq.s32.totalorder %v17, %v29
    %31 = vset.pattern.permute.xlu0 1
    %32 = vperm.xlu0 %31, %v26
    %v33 = vpop.permute.xlu0 %32
    %vm34 = vcmp.eq.s32.totalorder %v17, %v33
    %vm35 = vmor %vm30, %vm34
    %v36 = vsel %vm35, 1, 0
    %v37 = vcvt.s32.f32 %v36
    %v38 = vpack.c.bf16 %v37, %v37
    %v43 = vunpack.c.l.b16 %v22
    %v44 = vunpack.c.l.b16 %v23
    %v45 = vunpack.c.l.b16 %v24
    %v46 = vunpack.c.l.b16 %v25
    %v47 = vpack.c.b16 %v44, %v43
    %v48 = vpack.c.b16 %v46, %v45
    %vm50 = vcmask 244736
    %v52 = vsel %vm50, %v38, 0
    %vm54 = vcmask 1046528
    %v56 = vsel %vm54, %v48, 0
    %58 = vmatprep.subr.bf16.mxu0 0
    %59 = vmatpush1.bf16.msra.mxu0 %v47
    %60 = vmatprep.subr.bf16.mxu0 0
    %61 = vmatpush1.bf16.msra.mxu0 %v56
    %62 = vmatprep.subr.bf16.mxu0 0
    %63 = vmatpush1.bf16.msra.mxu0 0
    %64 = vmatprep.subr.bf16.mxu0 0
    %65 = vmatpush1.bf16.msra.mxu0 0
    %66 = vmatprep.subr.bf16.mxu0 0
    %67 = vmatpush1.bf16.msra.mxu0 0
    %68 = vmatprep.subr.bf16.mxu0 0
    %69 = vmatpush1.bf16.msra.mxu0 0
    %70 = vmatprep.subr.bf16.mxu0 0
    %71 = vmatpush1.bf16.msra.mxu0 0
    %72 = vmatprep.subr.bf16.mxu0 0
    %73 = vmatpush1.bf16.msra.mxu0 0
    %74 = vmatprep.subr.bf16.mxu0 0
    %75 = vmatpush1.bf16.msra.mxu0 0
    %76 = vmatprep.subr.bf16.mxu0 0
    %77 = vmatpush1.bf16.msra.mxu0 0
    %78 = vmatprep.subr.bf16.mxu0 0
    %79 = vmatpush1.bf16.msra.mxu0 0
    %80 = vmatprep.subr.bf16.mxu0 0
    %81 = vmatpush1.bf16.msra.mxu0 0
    %82 = vmatprep.subr.bf16.mxu0 0
    %83 = vmatpush1.bf16.msra.mxu0 0
    %84 = vmatprep.subr.bf16.mxu0 0
    %85 = vmatpush1.bf16.msra.mxu0 0
    %86 = vmatprep.subr.bf16.mxu0 0
    %87 = vmatpush1.bf16.msra.mxu0 0
    %88 = vmatprep.subr.bf16.mxu0 0
    %89 = vmatpush1.bf16.msra.mxu0 0
    %90 = vmatprep.mubr.bf16.mxu0 0
    %91 = vmatmul.mubr.bf16.gmra.mrb[0].mxu0 %v52
    %v92 = vpop.f32.mrb[0].mxu0
    %v93 = vadd.f32 0.0, %v92
    %v94 = vpop.f32.mrb[0].mxu0
    %v95 = vpop.f32.mrb[0].mxu0
    %v96 = vpop.f32.mrb[0].mxu0
    %97 = vdwg.mxu0
    %v102 = vunpack.c.l.b16 %v18
    %v103 = vunpack.c.l.b16 %v19
    %v104 = vunpack.c.l.b16 %v20
    %v105 = vunpack.c.l.b16 %v21
    %v106 = vpack.c.b16 %v103, %v102
    %v107 = vpack.c.b16 %v105, %v104
    %v110 = vsel %vm54, %v107, 0
    %112 = vmatprep.subr.bf16.mxu0 0
    %113 = vmatpush1.bf16.msra.mxu0 %v106
    %114 = vmatprep.subr.bf16.mxu0 0
    %115 = vmatpush1.bf16.msra.mxu0 %v110
    %116 = vmatprep.subr.bf16.mxu0 0
    %117 = vmatpush1.bf16.msra.mxu0 0
    %118 = vmatprep.subr.bf16.mxu0 0
    %119 = vmatpush1.bf16.msra.mxu0 0
    %120 = vmatprep.subr.bf16.mxu0 0
    %121 = vmatpush1.bf16.msra.mxu0 0
    %122 = vmatprep.subr.bf16.mxu0 0
    %123 = vmatpush1.bf16.msra.mxu0 0
    %124 = vmatprep.subr.bf16.mxu0 0
    %125 = vmatpush1.bf16.msra.mxu0 0
    %126 = vmatprep.subr.bf16.mxu0 0
    %127 = vmatpush1.bf16.msra.mxu0 0
    %128 = vmatprep.subr.bf16.mxu0 0
    %129 = vmatpush1.bf16.msra.mxu0 0
    %130 = vmatprep.subr.bf16.mxu0 0
    %131 = vmatpush1.bf16.msra.mxu0 0
    %132 = vmatprep.subr.bf16.mxu0 0
    %133 = vmatpush1.bf16.msra.mxu0 0
    %134 = vmatprep.subr.bf16.mxu0 0
    %135 = vmatpush1.bf16.msra.mxu0 0
    %136 = vmatprep.subr.bf16.mxu0 0
    %137 = vmatpush1.bf16.msra.mxu0 0
    %138 = vmatprep.subr.bf16.mxu0 0
    %139 = vmatpush1.bf16.msra.mxu0 0
    %140 = vmatprep.subr.bf16.mxu0 0
    %141 = vmatpush1.bf16.msra.mxu0 0
    %142 = vmatprep.subr.bf16.mxu0 0
    %143 = vmatpush1.bf16.msra.mxu0 0
    %144 = vmatprep.mubr.bf16.mxu0 0
    %145 = vmatmul.mubr.bf16.gmra.mrb[0].mxu0 %v52
    %v146 = vpop.f32.mrb[0].mxu0
    %v147 = vadd.f32 %v93, %v146
    %v148 = vpop.f32.mrb[0].mxu0
    %v149 = vpop.f32.mrb[0].mxu0
    %v150 = vpop.f32.mrb[0].mxu0
    %151 = vdwg.mxu0
    %vm152 = vcmask 123904
    %153 = vst.msk [vmem:[#allocation2] sm:$0x3] %vm152, %v147
    %v154 = vld [vmem:[%s0] sm:$0x3]
    %155 = vset.pattern.permute.xlu0 2
    %156 = vperm.xlu0 %155, %v154
    %v157 = vpop.permute.xlu0 %156
    %vm158 = vcmp.eq.s32.totalorder %v17, %v157
    %159 = vset.pattern.permute.xlu0 3
    %160 = vperm.xlu0 %159, %v154
    %v161 = vpop.permute.xlu0 %160
    %vm162 = vcmp.eq.s32.totalorder %v17, %v161
    %vm163 = vmor %vm158, %vm162
    %v164 = vsel %vm163, 1, 0
    %v165 = vcvt.s32.f32 %v164
    %v166 = vpack.c.bf16 %v165, %v165
    %v168 = vsel %vm50, %v166, 0
    %170 = vmatprep.subr.bf16.mxu0 0
    %171 = vmatpush1.bf16.msra.mxu0 %v47
    %172 = vmatprep.subr.bf16.mxu0 0
    %173 = vmatpush1.bf16.msra.mxu0 %v56
    %174 = vmatprep.subr.bf16.mxu0 0
    %175 = vmatpush1.bf16.msra.mxu0 0
    %176 = vmatprep.subr.bf16.mxu0 0
    %177 = vmatpush1.bf16.msra.mxu0 0
    %178 = vmatprep.subr.bf16.mxu0 0
    %179 = vmatpush1.bf16.msra.mxu0 0
    %180 = vmatprep.subr.bf16.mxu0 0
    %181 = vmatpush1.bf16.msra.mxu0 0
    %182 = vmatprep.subr.bf16.mxu0 0
    %183 = vmatpush1.bf16.msra.mxu0 0
    %184 = vmatprep.subr.bf16.mxu0 0
    %185 = vmatpush1.bf16.msra.mxu0 0
    %186 = vmatprep.subr.bf16.mxu0 0
    %187 = vmatpush1.bf16.msra.mxu0 0
    %188 = vmatprep.subr.bf16.mxu0 0
    %189 = vmatpush1.bf16.msra.mxu0 0
    %190 = vmatprep.subr.bf16.mxu0 0
    %191 = vmatpush1.bf16.msra.mxu0 0
    %192 = vmatprep.subr.bf16.mxu0 0
    %193 = vmatpush1.bf16.msra.mxu0 0
    %194 = vmatprep.subr.bf16.mxu0 0
    %195 = vmatpush1.bf16.msra.mxu0 0
    %196 = vmatprep.subr.bf16.mxu0 0
    %197 = vmatpush1.bf16.msra.mxu0 0
    %198 = vmatprep.subr.bf16.mxu0 0
    %199 = vmatpush1.bf16.msra.mxu0 0
    %200 = vmatprep.subr.bf16.mxu0 0
    %201 = vmatpush1.bf16.msra.mxu0 0
    %202 = vmatprep.mubr.bf16.mxu0 0
    %203 = vmatmul.mubr.bf16.gmra.mrb[0].mxu0 %v168
    %v204 = vpop.f32.mrb[0].mxu0
    %v205 = vadd.f32 0.0, %v204
    %v206 = vpop.f32.mrb[0].mxu0
    %v207 = vpop.f32.mrb[0].mxu0
    %v208 = vpop.f32.mrb[0].mxu0
    %209 = vdwg.mxu0
    %210 = vmatprep.subr.bf16.mxu0 0
    %211 = vmatpush1.bf16.msra.mxu0 %v106
    %212 = vmatprep.subr.bf16.mxu0 0
    %213 = vmatpush1.bf16.msra.mxu0 %v110
    %214 = vmatprep.subr.bf16.mxu0 0
    %215 = vmatpush1.bf16.msra.mxu0 0
    %216 = vmatprep.subr.bf16.mxu0 0
    %217 = vmatpush1.bf16.msra.mxu0 0
    %218 = vmatprep.subr.bf16.mxu0 0
    %219 = vmatpush1.bf16.msra.mxu0 0
    %220 = vmatprep.subr.bf16.mxu0 0
    %221 = vmatpush1.bf16.msra.mxu0 0
    %222 = vmatprep.subr.bf16.mxu0 0
    %223 = vmatpush1.bf16.msra.mxu0 0
    %224 = vmatprep.subr.bf16.mxu0 0
    %225 = vmatpush1.bf16.msra.mxu0 0
    %226 = vmatprep.subr.bf16.mxu0 0
    %227 = vmatpush1.bf16.msra.mxu0 0
    %228 = vmatprep.subr.bf16.mxu0 0
    %229 = vmatpush1.bf16.msra.mxu0 0
    %230 = vmatprep.subr.bf16.mxu0 0
    %231 = vmatpush1.bf16.msra.mxu0 0
    %232 = vmatprep.subr.bf16.mxu0 0
    %233 = vmatpush1.bf16.msra.mxu0 0
    %234 = vmatprep.subr.bf16.mxu0 0
    %235 = vmatpush1.bf16.msra.mxu0 0
    %236 = vmatprep.subr.bf16.mxu0 0
    %237 = vmatpush1.bf16.msra.mxu0 0
    %238 = vmatprep.subr.bf16.mxu0 0
    %239 = vmatpush1.bf16.msra.mxu0 0
    %240 = vmatprep.subr.bf16.mxu0 0
    %241 = vmatpush1.bf16.msra.mxu0 0
    %242 = vmatprep.mubr.bf16.mxu0 0
    %243 = vmatmul.mubr.bf16.gmra.mrb[0].mxu0 %v168
    %v244 = vpop.f32.mrb[0].mxu0
    %v245 = vadd.f32 %v205, %v244
    %v246 = vpop.f32.mrb[0].mxu0
    %v247 = vpop.f32.mrb[0].mxu0
    %v248 = vpop.f32.mrb[0].mxu0
    %249 = vdwg.mxu0
    %251 = vrot.lane.b32.xlu0 %v245, 16
    %v252 = vpop.permute.xlu0 %251
    %vm254 = vcmask 255104
    %255 = vst.msk [vmem:[#allocation2] sm:$0x3] %vm254, %v252
    %v256 = vld [vmem:[%s0] sm:$0x3]
    %257 = vset.pattern.permute.xlu0 4
    %258 = vperm.xlu0 %257, %v256
    %v259 = vpop.permute.xlu0 %258
    %vm260 = vcmp.eq.s32.totalorder %v17, %v259
    %261 = vset.pattern.permute.xlu0 5
    %262 = vperm.xlu0 %261, %v256
    %v263 = vpop.permute.xlu0 %262
    %vm264 = vcmp.eq.s32.totalorder %v17, %v263
    %vm265 = vmor %vm260, %vm264
    %v266 = vsel %vm265, 1, 0
    %v267 = vcvt.s32.f32 %v266
    %v268 = vpack.c.bf16 %v267, %v267
    %v270 = vsel %vm50, %v268, 0
    %272 = vmatprep.subr.bf16.mxu0 0
    %273 = vmatpush1.bf16.msra.mxu0 %v47
    %274 = vmatprep.subr.bf16.mxu0 0
    %275 = vmatpush1.bf16.msra.mxu0 %v56
    %276 = vmatprep.subr.bf16.mxu0 0
    %277 = vmatpush1.bf16.msra.mxu0 0
    %278 = vmatprep.subr.bf16.mxu0 0
    %279 = vmatpush1.bf16.msra.mxu0 0
    %280 = vmatprep.subr.bf16.mxu0 0
    %281 = vmatpush1.bf16.msra.mxu0 0
    %282 = vmatprep.subr.bf16.mxu0 0
    %283 = vmatpush1.bf16.msra.mxu0 0
    %284 = vmatprep.subr.bf16.mxu0 0
    %285 = vmatpush1.bf16.msra.mxu0 0
    %286 = vmatprep.subr.bf16.mxu0 0
    %287 = vmatpush1.bf16.msra.mxu0 0
    %288 = vmatprep.subr.bf16.mxu0 0
    %289 = vmatpush1.bf16.msra.mxu0 0
    %290 = vmatprep.subr.bf16.mxu0 0
    %291 = vmatpush1.bf16.msra.mxu0 0
    %292 = vmatprep.subr.bf16.mxu0 0
    %293 = vmatpush1.bf16.msra.mxu0 0
    %294 = vmatprep.subr.bf16.mxu0 0
    %295 = vmatpush1.bf16.msra.mxu0 0
    %296 = vmatprep.subr.bf16.mxu0 0
    %297 = vmatpush1.bf16.msra.mxu0 0
    %298 = vmatprep.subr.bf16.mxu0 0
    %299 = vmatpush1.bf16.msra.mxu0 0
    %300 = vmatprep.subr.bf16.mxu0 0
    %301 = vmatpush1.bf16.msra.mxu0 0
    %302 = vmatprep.subr.bf16.mxu0 0
    %303 = vmatpush1.bf16.msra.mxu0 0
    %304 = vmatprep.mubr.bf16.mxu0 0
    %305 = vmatmul.mubr.bf16.gmra.mrb[0].mxu0 %v270
    %v306 = vpop.f32.mrb[0].mxu0
    %v307 = vadd.f32 0.0, %v306
    %v308 = vpop.f32.mrb[0].mxu0
    %v309 = vpop.f32.mrb[0].mxu0
    %v310 = vpop.f32.mrb[0].mxu0
    %311 = vdwg.mxu0
    %312 = vmatprep.subr.bf16.mxu0 0
    %313 = vmatpush1.bf16.msra.mxu0 %v106
    %314 = vmatprep.subr.bf16.mxu0 0
    %315 = vmatpush1.bf16.msra.mxu0 %v110
    %316 = vmatprep.subr.bf16.mxu0 0
    %317 = vmatpush1.bf16.msra.mxu0 0
    %318 = vmatprep.subr.bf16.mxu0 0
    %319 = vmatpush1.bf16.msra.mxu0 0
    %320 = vmatprep.subr.bf16.mxu0 0
    %321 = vmatpush1.bf16.msra.mxu0 0
    %322 = vmatprep.subr.bf16.mxu0 0
    %323 = vmatpush1.bf16.msra.mxu0 0
    %324 = vmatprep.subr.bf16.mxu0 0
    %325 = vmatpush1.bf16.msra.mxu0 0
    %326 = vmatprep.subr.bf16.mxu0 0
    %327 = vmatpush1.bf16.msra.mxu0 0
    %328 = vmatprep.subr.bf16.mxu0 0
    %329 = vmatpush1.bf16.msra.mxu0 0
    %330 = vmatprep.subr.bf16.mxu0 0
    %331 = vmatpush1.bf16.msra.mxu0 0
    %332 = vmatprep.subr.bf16.mxu0 0
    %333 = vmatpush1.bf16.msra.mxu0 0
    %334 = vmatprep.subr.bf16.mxu0 0
    %335 = vmatpush1.bf16.msra.mxu0 0
    %336 = vmatprep.subr.bf16.mxu0 0
    %337 = vmatpush1.bf16.msra.mxu0 0
    %338 = vmatprep.subr.bf16.mxu0 0
    %339 = vmatpush1.bf16.msra.mxu0 0
    %340 = vmatprep.subr.bf16.mxu0 0
    %341 = vmatpush1.bf16.msra.mxu0 0
    %342 = vmatprep.subr.bf16.mxu0 0
    %343 = vmatpush1.bf16.msra.mxu0 0
    %344 = vmatprep.mubr.bf16.mxu0 0
    %345 = vmatmul.mubr.bf16.gmra.mrb[0].mxu0 %v270
    %v346 = vpop.f32.mrb[0].mxu0
    %v347 = vadd.f32 %v307, %v346
    %v348 = vpop.f32.mrb[0].mxu0
    %v349 = vpop.f32.mrb[0].mxu0
    %v350 = vpop.f32.mrb[0].mxu0
    %351 = vdwg.mxu0
    %353 = vrot.lane.b32.xlu0 %v347, 32
    %v354 = vpop.permute.xlu0 %353
    %vm356 = vcmask 386304
    %357 = vst.msk [vmem:[#allocation2] sm:$0x3] %vm356, %v354
    %v358 = vld [vmem:[%s0] sm:$0x3]
    %359 = vset.pattern.permute.xlu0 6
    %360 = vperm.xlu0 %359, %v358
    %v361 = vpop.permute.xlu0 %360
    %vm362 = vcmp.eq.s32.totalorder %v17, %v361
    %363 = vset.pattern.permute.xlu0 7
    %364 = vperm.xlu0 %363, %v358
    %v365 = vpop.permute.xlu0 %364
    %vm366 = vcmp.eq.s32.totalorder %v17, %v365
    %vm367 = vmor %vm362, %vm366
    %v368 = vsel %vm367, 1, 0
    %v369 = vcvt.s32.f32 %v368
    %v370 = vpack.c.bf16 %v369, %v369
    %v372 = vsel %vm50, %v370, 0
    %374 = vmatprep.subr.bf16.mxu0 0
    %375 = vmatpush1.bf16.msra.mxu0 %v47
    %376 = vmatprep.subr.bf16.mxu0 0
    %377 = vmatpush1.bf16.msra.mxu0 %v56
    %378 = vmatprep.subr.bf16.mxu0 0
    %379 = vmatpush1.bf16.msra.mxu0 0
    %380 = vmatprep.subr.bf16.mxu0 0
    %381 = vmatpush1.bf16.msra.mxu0 0
    %382 = vmatprep.subr.bf16.mxu0 0
    %383 = vmatpush1.bf16.msra.mxu0 0
    %384 = vmatprep.subr.bf16.mxu0 0
    %385 = vmatpush1.bf16.msra.mxu0 0
    %386 = vmatprep.subr.bf16.mxu0 0
    %387 = vmatpush1.bf16.msra.mxu0 0
    %388 = vmatprep.subr.bf16.mxu0 0
    %389 = vmatpush1.bf16.msra.mxu0 0
    %390 = vmatprep.subr.bf16.mxu0 0
    %391 = vmatpush1.bf16.msra.mxu0 0
    %392 = vmatprep.subr.bf16.mxu0 0
    %393 = vmatpush1.bf16.msra.mxu0 0
    %394 = vmatprep.subr.bf16.mxu0 0
    %395 = vmatpush1.bf16.msra.mxu0 0
    %396 = vmatprep.subr.bf16.mxu0 0
    %397 = vmatpush1.bf16.msra.mxu0 0
    %398 = vmatprep.subr.bf16.mxu0 0
    %399 = vmatpush1.bf16.msra.mxu0 0
    %400 = vmatprep.subr.bf16.mxu0 0
    %401 = vmatpush1.bf16.msra.mxu0 0
    %402 = vmatprep.subr.bf16.mxu0 0
    %403 = vmatpush1.bf16.msra.mxu0 0
    %404 = vmatprep.subr.bf16.mxu0 0
    %405 = vmatpush1.bf16.msra.mxu0 0
    %406 = vmatprep.mubr.bf16.mxu0 0
    %407 = vmatmul.mubr.bf16.gmra.mrb[0].mxu0 %v372
    %v408 = vpop.f32.mrb[0].mxu0
    %v409 = vadd.f32 0.0, %v408
    %v410 = vpop.f32.mrb[0].mxu0
    %v411 = vpop.f32.mrb[0].mxu0
    %v412 = vpop.f32.mrb[0].mxu0
    %413 = vdwg.mxu0
    %414 = vmatprep.subr.bf16.mxu0 0
    %415 = vmatpush1.bf16.msra.mxu0 %v106
    %416 = vmatprep.subr.bf16.mxu0 0
    %417 = vmatpush1.bf16.msra.mxu0 %v110
    %418 = vmatprep.subr.bf16.mxu0 0
    %419 = vmatpush1.bf16.msra.mxu0 0
    %420 = vmatprep.subr.bf16.mxu0 0
    %421 = vmatpush1.bf16.msra.mxu0 0
    %422 = vmatprep.subr.bf16.mxu0 0
    %423 = vmatpush1.bf16.msra.mxu0 0
    %424 = vmatprep.subr.bf16.mxu0 0
    %425 = vmatpush1.bf16.msra.mxu0 0
    %426 = vmatprep.subr.bf16.mxu0 0
    %427 = vmatpush1.bf16.msra.mxu0 0
    %428 = vmatprep.subr.bf16.mxu0 0
    %429 = vmatpush1.bf16.msra.mxu0 0
    %430 = vmatprep.subr.bf16.mxu0 0
    %431 = vmatpush1.bf16.msra.mxu0 0
    %432 = vmatprep.subr.bf16.mxu0 0
    %433 = vmatpush1.bf16.msra.mxu0 0
    %434 = vmatprep.subr.bf16.mxu0 0
    %435 = vmatpush1.bf16.msra.mxu0 0
    %436 = vmatprep.subr.bf16.mxu0 0
    %437 = vmatpush1.bf16.msra.mxu0 0
    %438 = vmatprep.subr.bf16.mxu0 0
    %439 = vmatpush1.bf16.msra.mxu0 0
    %440 = vmatprep.subr.bf16.mxu0 0
    %441 = vmatpush1.bf16.msra.mxu0 0
    %442 = vmatprep.subr.bf16.mxu0 0
    %443 = vmatpush1.bf16.msra.mxu0 0
    %444 = vmatprep.subr.bf16.mxu0 0
    %445 = vmatpush1.bf16.msra.mxu0 0
    %446 = vmatprep.mubr.bf16.mxu0 0
    %447 = vmatmul.mubr.bf16.gmra.mrb[0].mxu0 %v372
    %v448 = vpop.f32.mrb[0].mxu0
    %v449 = vadd.f32 %v409, %v448
    %v450 = vpop.f32.mrb[0].mxu0
    %v451 = vpop.f32.mrb[0].mxu0
    %v452 = vpop.f32.mrb[0].mxu0
    %453 = vdwg.mxu0
    %455 = vrot.lane.b32.xlu0 %v449, 48
    %v456 = vpop.permute.xlu0 %455
    %vm458 = vcmask 517504
    %459 = vst.msk [vmem:[#allocation2] sm:$0x3] %vm458, %v456
    %v460 = vld [vmem:[%s0] sm:$0x3]
    %461 = vset.pattern.permute.xlu0 8
    %462 = vperm.xlu0 %461, %v460
    %v463 = vpop.permute.xlu0 %462
    %vm464 = vcmp.eq.s32.totalorder %v17, %v463
    %465 = vset.pattern.permute.xlu0 9
    %466 = vperm.xlu0 %465, %v460
    %v467 = vpop.permute.xlu0 %466
    %vm468 = vcmp.eq.s32.totalorder %v17, %v467
    %vm469 = vmor %vm464, %vm468
    %v470 = vsel %vm469, 1, 0
    %v471 = vcvt.s32.f32 %v470
    %v472 = vpack.c.bf16 %v471, %v471
    %v474 = vsel %vm50, %v472, 0
    %476 = vmatprep.subr.bf16.mxu0 0
    %477 = vmatpush1.bf16.msra.mxu0 %v47
    %478 = vmatprep.subr.bf16.mxu0 0
    %479 = vmatpush1.bf16.msra.mxu0 %v56
    %480 = vmatprep.subr.bf16.mxu0 0
    %481 = vmatpush1.bf16.msra.mxu0 0
    %482 = vmatprep.subr.bf16.mxu0 0
    %483 = vmatpush1.bf16.msra.mxu0 0
    %484 = vmatprep.subr.bf16.mxu0 0
    %485 = vmatpush1.bf16.msra.mxu0 0
    %486 = vmatprep.subr.bf16.mxu0 0
    %487 = vmatpush1.bf16.msra.mxu0 0
    %488 = vmatprep.subr.bf16.mxu0 0
    %489 = vmatpush1.bf16.msra.mxu0 0
    %490 = vmatprep.subr.bf16.mxu0 0
    %491 = vmatpush1.bf16.msra.mxu0 0
    %492 = vmatprep.subr.bf16.mxu0 0
    %493 = vmatpush1.bf16.msra.mxu0 0
    %494 = vmatprep.subr.bf16.mxu0 0
    %495 = vmatpush1.bf16.msra.mxu0 0
    %496 = vmatprep.subr.bf16.mxu0 0
    %497 = vmatpush1.bf16.msra.mxu0 0
    %498 = vmatprep.subr.bf16.mxu0 0
    %499 = vmatpush1.bf16.msra.mxu0 0
    %500 = vmatprep.subr.bf16.mxu0 0
    %501 = vmatpush1.bf16.msra.mxu0 0
    %502 = vmatprep.subr.bf16.mxu0 0
    %503 = vmatpush1.bf16.msra.mxu0 0
    %504 = vmatprep.subr.bf16.mxu0 0
    %505 = vmatpush1.bf16.msra.mxu0 0
    %506 = vmatprep.subr.bf16.mxu0 0
    %507 = vmatpush1.bf16.msra.mxu0 0
    %508 = vmatprep.mubr.bf16.mxu0 0
    %509 = vmatmul.mubr.bf16.gmra.mrb[0].mxu0 %v474
    %v510 = vpop.f32.mrb[0].mxu0
    %v511 = vadd.f32 0.0, %v510
    %v512 = vpop.f32.mrb[0].mxu0
    %v513 = vpop.f32.mrb[0].mxu0
    %v514 = vpop.f32.mrb[0].mxu0
    %515 = vdwg.mxu0
    %516 = vmatprep.subr.bf16.mxu0 0
    %517 = vmatpush1.bf16.msra.mxu0 %v106
    %518 = vmatprep.subr.bf16.mxu0 0
    %519 = vmatpush1.bf16.msra.mxu0 %v110
    %520 = vmatprep.subr.bf16.mxu0 0
    %521 = vmatpush1.bf16.msra.mxu0 0
    %522 = vmatprep.subr.bf16.mxu0 0
    %523 = vmatpush1.bf16.msra.mxu0 0
    %524 = vmatprep.subr.bf16.mxu0 0
    %525 = vmatpush1.bf16.msra.mxu0 0
    %526 = vmatprep.subr.bf16.mxu0 0
    %527 = vmatpush1.bf16.msra.mxu0 0
    %528 = vmatprep.subr.bf16.mxu0 0
    %529 = vmatpush1.bf16.msra.mxu0 0
    %530 = vmatprep.subr.bf16.mxu0 0
    %531 = vmatpush1.bf16.msra.mxu0 0
    %532 = vmatprep.subr.bf16.mxu0 0
    %533 = vmatpush1.bf16.msra.mxu0 0
    %534 = vmatprep.subr.bf16.mxu0 0
    %535 = vmatpush1.bf16.msra.mxu0 0
    %536 = vmatprep.subr.bf16.mxu0 0
    %537 = vmatpush1.bf16.msra.mxu0 0
    %538 = vmatprep.subr.bf16.mxu0 0
    %539 = vmatpush1.bf16.msra.mxu0 0
    %540 = vmatprep.subr.bf16.mxu0 0
    %541 = vmatpush1.bf16.msra.mxu0 0
    %542 = vmatprep.subr.bf16.mxu0 0
    %543 = vmatpush1.bf16.msra.mxu0 0
    %544 = vmatprep.subr.bf16.mxu0 0
    %545 = vmatpush1.bf16.msra.mxu0 0
    %546 = vmatprep.subr.bf16.mxu0 0
    %547 = vmatpush1.bf16.msra.mxu0 0
    %548 = vmatprep.mubr.bf16.mxu0 0
    %549 = vmatmul.mubr.bf16.gmra.mrb[0].mxu0 %v474
    %v550 = vpop.f32.mrb[0].mxu0
    %v551 = vadd.f32 %v511, %v550
    %v552 = vpop.f32.mrb[0].mxu0
    %v553 = vpop.f32.mrb[0].mxu0
    %v554 = vpop.f32.mrb[0].mxu0
    %555 = vdwg.mxu0
    %557 = vrot.lane.b32.xlu0 %v551, 64
    %v558 = vpop.permute.xlu0 %557
    %vm560 = vcmask 648704
    %561 = vst.msk [vmem:[#allocation2] sm:$0x3] %vm560, %v558
    %v562 = vld [vmem:[%s0] sm:$0x3]
    %563 = vset.pattern.permute.xlu0 10
    %564 = vperm.xlu0 %563, %v562
    %v565 = vpop.permute.xlu0 %564
    %vm566 = vcmp.eq.s32.totalorder %v17, %v565
    %567 = vset.pattern.permute.xlu0 11
    %568 = vperm.xlu0 %567, %v562
    %v569 = vpop.permute.xlu0 %568
    %vm570 = vcmp.eq.s32.totalorder %v17, %v569
    %vm571 = vmor %vm566, %vm570
    %v572 = vsel %vm571, 1, 0
    %v573 = vcvt.s32.f32 %v572
    %v574 = vpack.c.bf16 %v573, %v573
    %v576 = vsel %vm50, %v574, 0
    %578 = vmatprep.subr.bf16.mxu0 0
    %579 = vmatpush1.bf16.msra.mxu0 %v47
    %580 = vmatprep.subr.bf16.mxu0 0
    %581 = vmatpush1.bf16.msra.mxu0 %v56
    %582 = vmatprep.subr.bf16.mxu0 0
    %583 = vmatpush1.bf16.msra.mxu0 0
    %584 = vmatprep.subr.bf16.mxu0 0
    %585 = vmatpush1.bf16.msra.mxu0 0
    %586 = vmatprep.subr.bf16.mxu0 0
    %587 = vmatpush1.bf16.msra.mxu0 0
    %588 = vmatprep.subr.bf16.mxu0 0
    %589 = vmatpush1.bf16.msra.mxu0 0
    %590 = vmatprep.subr.bf16.mxu0 0
    %591 = vmatpush1.bf16.msra.mxu0 0
    %592 = vmatprep.subr.bf16.mxu0 0
    %593 = vmatpush1.bf16.msra.mxu0 0
    %594 = vmatprep.subr.bf16.mxu0 0
    %595 = vmatpush1.bf16.msra.mxu0 0
    %596 = vmatprep.subr.bf16.mxu0 0
    %597 = vmatpush1.bf16.msra.mxu0 0
    %598 = vmatprep.subr.bf16.mxu0 0
    %599 = vmatpush1.bf16.msra.mxu0 0
    %600 = vmatprep.subr.bf16.mxu0 0
    %601 = vmatpush1.bf16.msra.mxu0 0
    %602 = vmatprep.subr.bf16.mxu0 0
    %603 = vmatpush1.bf16.msra.mxu0 0
    %604 = vmatprep.subr.bf16.mxu0 0
    %605 = vmatpush1.bf16.msra.mxu0 0
    %606 = vmatprep.subr.bf16.mxu0 0
    %607 = vmatpush1.bf16.msra.mxu0 0
    %608 = vmatprep.subr.bf16.mxu0 0
    %609 = vmatpush1.bf16.msra.mxu0 0
    %610 = vmatprep.mubr.bf16.mxu0 0
    %611 = vmatmul.mubr.bf16.gmra.mrb[0].mxu0 %v576
    %v612 = vpop.f32.mrb[0].mxu0
    %v613 = vadd.f32 0.0, %v612
    %v614 = vpop.f32.mrb[0].mxu0
    %v615 = vpop.f32.mrb[0].mxu0
    %v616 = vpop.f32.mrb[0].mxu0
    %617 = vdwg.mxu0
    %618 = vmatprep.subr.bf16.mxu0 0
    %619 = vmatpush1.bf16.msra.mxu0 %v106
    %620 = vmatprep.subr.bf16.mxu0 0
    %621 = vmatpush1.bf16.msra.mxu0 %v110
    %622 = vmatprep.subr.bf16.mxu0 0
    %623 = vmatpush1.bf16.msra.mxu0 0
    %624 = vmatprep.subr.bf16.mxu0 0
    %625 = vmatpush1.bf16.msra.mxu0 0
    %626 = vmatprep.subr.bf16.mxu0 0
    %627 = vmatpush1.bf16.msra.mxu0 0
    %628 = vmatprep.subr.bf16.mxu0 0
    %629 = vmatpush1.bf16.msra.mxu0 0
    %630 = vmatprep.subr.bf16.mxu0 0
    %631 = vmatpush1.bf16.msra.mxu0 0
    %632 = vmatprep.subr.bf16.mxu0 0
    %633 = vmatpush1.bf16.msra.mxu0 0
    %634 = vmatprep.subr.bf16.mxu0 0
    %635 = vmatpush1.bf16.msra.mxu0 0
    %636 = vmatprep.subr.bf16.mxu0 0
    %637 = vmatpush1.bf16.msra.mxu0 0
    %638 = vmatprep.subr.bf16.mxu0 0
    %639 = vmatpush1.bf16.msra.mxu0 0
    %640 = vmatprep.subr.bf16.mxu0 0
    %641 = vmatpush1.bf16.msra.mxu0 0
    %642 = vmatprep.subr.bf16.mxu0 0
    %643 = vmatpush1.bf16.msra.mxu0 0
    %644 = vmatprep.subr.bf16.mxu0 0
    %645 = vmatpush1.bf16.msra.mxu0 0
    %646 = vmatprep.subr.bf16.mxu0 0
    %647 = vmatpush1.bf16.msra.mxu0 0
    %648 = vmatprep.subr.bf16.mxu0 0
    %649 = vmatpush1.bf16.msra.mxu0 0
    %650 = vmatprep.mubr.bf16.mxu0 0
    %651 = vmatmul.mubr.bf16.gmra.mrb[0].mxu0 %v576
    %v652 = vpop.f32.mrb[0].mxu0
    %v653 = vadd.f32 %v613, %v652
    %v654 = vpop.f32.mrb[0].mxu0
    %v655 = vpop.f32.mrb[0].mxu0
    %v656 = vpop.f32.mrb[0].mxu0
    %657 = vdwg.mxu0
    %659 = vrot.lane.b32.xlu0 %v653, 80
    %v660 = vpop.permute.xlu0 %659
    %vm662 = vcmask 779904
    %663 = vst.msk [vmem:[#allocation2] sm:$0x3] %vm662, %v660
    %v664 = vld [vmem:[%s0] sm:$0x3]
    %665 = vset.pattern.permute.xlu0 12
    %666 = vperm.xlu0 %665, %v664
    %v667 = vpop.permute.xlu0 %666
    %vm668 = vcmp.eq.s32.totalorder %v17, %v667
    %669 = vset.pattern.permute.xlu0 13
    %670 = vperm.xlu0 %669, %v664
    %v671 = vpop.permute.xlu0 %670
    %vm672 = vcmp.eq.s32.totalorder %v17, %v671
    %vm673 = vmor %vm668, %vm672
    %v674 = vsel %vm673, 1, 0
    %v675 = vcvt.s32.f32 %v674
    %v676 = vpack.c.bf16 %v675, %v675
    %v678 = vsel %vm50, %v676, 0
    %680 = vmatprep.subr.bf16.mxu0 0
    %681 = vmatpush1.bf16.msra.mxu0 %v47
    %682 = vmatprep.subr.bf16.mxu0 0
    %683 = vmatpush1.bf16.msra.mxu0 %v56
    %684 = vmatprep.subr.bf16.mxu0 0
    %685 = vmatpush1.bf16.msra.mxu0 0
    %686 = vmatprep.subr.bf16.mxu0 0
    %687 = vmatpush1.bf16.msra.mxu0 0
    %688 = vmatprep.subr.bf16.mxu0 0
    %689 = vmatpush1.bf16.msra.mxu0 0
    %690 = vmatprep.subr.bf16.mxu0 0
    %691 = vmatpush1.bf16.msra.mxu0 0
    %692 = vmatprep.subr.bf16.mxu0 0
    %693 = vmatpush1.bf16.msra.mxu0 0
    %694 = vmatprep.subr.bf16.mxu0 0
    %695 = vmatpush1.bf16.msra.mxu0 0
    %696 = vmatprep.subr.bf16.mxu0 0
    %697 = vmatpush1.bf16.msra.mxu0 0
    %698 = vmatprep.subr.bf16.mxu0 0
    %699 = vmatpush1.bf16.msra.mxu0 0
    %700 = vmatprep.subr.bf16.mxu0 0
    %701 = vmatpush1.bf16.msra.mxu0 0
    %702 = vmatprep.subr.bf16.mxu0 0
    %703 = vmatpush1.bf16.msra.mxu0 0
    %704 = vmatprep.subr.bf16.mxu0 0
    %705 = vmatpush1.bf16.msra.mxu0 0
    %706 = vmatprep.subr.bf16.mxu0 0
    %707 = vmatpush1.bf16.msra.mxu0 0
    %708 = vmatprep.subr.bf16.mxu0 0
    %709 = vmatpush1.bf16.msra.mxu0 0
    %710 = vmatprep.subr.bf16.mxu0 0
    %711 = vmatpush1.bf16.msra.mxu0 0
    %712 = vmatprep.mubr.bf16.mxu0 0
    %713 = vmatmul.mubr.bf16.gmra.mrb[0].mxu0 %v678
    %v714 = vpop.f32.mrb[0].mxu0
    %v715 = vadd.f32 0.0, %v714
    %v716 = vpop.f32.mrb[0].mxu0
    %v717 = vpop.f32.mrb[0].mxu0
    %v718 = vpop.f32.mrb[0].mxu0
    %719 = vdwg.mxu0
    %720 = vmatprep.subr.bf16.mxu0 0
    %721 = vmatpush1.bf16.msra.mxu0 %v106
    %722 = vmatprep.subr.bf16.mxu0 0
    %723 = vmatpush1.bf16.msra.mxu0 %v110
    %724 = vmatprep.subr.bf16.mxu0 0
    %725 = vmatpush1.bf16.msra.mxu0 0
    %726 = vmatprep.subr.bf16.mxu0 0
    %727 = vmatpush1.bf16.msra.mxu0 0
    %728 = vmatprep.subr.bf16.mxu0 0
    %729 = vmatpush1.bf16.msra.mxu0 0
    %730 = vmatprep.subr.bf16.mxu0 0
    %731 = vmatpush1.bf16.msra.mxu0 0
    %732 = vmatprep.subr.bf16.mxu0 0
    %733 = vmatpush1.bf16.msra.mxu0 0
    %734 = vmatprep.subr.bf16.mxu0 0
    %735 = vmatpush1.bf16.msra.mxu0 0
    %736 = vmatprep.subr.bf16.mxu0 0
    %737 = vmatpush1.bf16.msra.mxu0 0
    %738 = vmatprep.subr.bf16.mxu0 0
    %739 = vmatpush1.bf16.msra.mxu0 0
    %740 = vmatprep.subr.bf16.mxu0 0
    %741 = vmatpush1.bf16.msra.mxu0 0
    %742 = vmatprep.subr.bf16.mxu0 0
    %743 = vmatpush1.bf16.msra.mxu0 0
    %744 = vmatprep.subr.bf16.mxu0 0
    %745 = vmatpush1.bf16.msra.mxu0 0
    %746 = vmatprep.subr.bf16.mxu0 0
    %747 = vmatpush1.bf16.msra.mxu0 0
    %748 = vmatprep.subr.bf16.mxu0 0
    %749 = vmatpush1.bf16.msra.mxu0 0
    %750 = vmatprep.subr.bf16.mxu0 0
    %751 = vmatpush1.bf16.msra.mxu0 0
    %752 = vmatprep.mubr.bf16.mxu0 0
    %753 = vmatmul.mubr.bf16.gmra.mrb[0].mxu0 %v678
    %v754 = vpop.f32.mrb[0].mxu0
    %v755 = vadd.f32 %v715, %v754
    %v756 = vpop.f32.mrb[0].mxu0
    %v757 = vpop.f32.mrb[0].mxu0
    %v758 = vpop.f32.mrb[0].mxu0
    %759 = vdwg.mxu0
    %761 = vrot.lane.b32.xlu0 %v755, 96
    %v762 = vpop.permute.xlu0 %761
    %vm764 = vcmask 911104
    %765 = vst.msk [vmem:[#allocation2] sm:$0x3] %vm764, %v762
    %v766 = vld [vmem:[%s0] sm:$0x3]
    %767 = vset.pattern.permute.xlu0 14
    %768 = vperm.xlu0 %767, %v766
    %v769 = vpop.permute.xlu0 %768
    %vm770 = vcmp.eq.s32.totalorder %v17, %v769
    %771 = vset.pattern.permute.xlu0 15
    %772 = vperm.xlu0 %771, %v766
    %v773 = vpop.permute.xlu0 %772
    %vm774 = vcmp.eq.s32.totalorder %v17, %v773
    %vm775 = vmor %vm770, %vm774
    %v776 = vsel %vm775, 1, 0
    %v777 = vcvt.s32.f32 %v776
    %v778 = vpack.c.bf16 %v777, %v777
    %v780 = vsel %vm50, %v778, 0
    %782 = vmatprep.subr.bf16.mxu0 0
    %783 = vmatpush1.bf16.msra.mxu0 %v47
    %784 = vmatprep.subr.bf16.mxu0 0
    %785 = vmatpush1.bf16.msra.mxu0 %v56
    %786 = vmatprep.subr.bf16.mxu0 0
    %787 = vmatpush1.bf16.msra.mxu0 0
    %788 = vmatprep.subr.bf16.mxu0 0
    %789 = vmatpush1.bf16.msra.mxu0 0
    %790 = vmatprep.subr.bf16.mxu0 0
    %791 = vmatpush1.bf16.msra.mxu0 0
    %792 = vmatprep.subr.bf16.mxu0 0
    %793 = vmatpush1.bf16.msra.mxu0 0
    %794 = vmatprep.subr.bf16.mxu0 0
    %795 = vmatpush1.bf16.msra.mxu0 0
    %796 = vmatprep.subr.bf16.mxu0 0
    %797 = vmatpush1.bf16.msra.mxu0 0
    %798 = vmatprep.subr.bf16.mxu0 0
    %799 = vmatpush1.bf16.msra.mxu0 0
    %800 = vmatprep.subr.bf16.mxu0 0
    %801 = vmatpush1.bf16.msra.mxu0 0
    %802 = vmatprep.subr.bf16.mxu0 0
    %803 = vmatpush1.bf16.msra.mxu0 0
    %804 = vmatprep.subr.bf16.mxu0 0
    %805 = vmatpush1.bf16.msra.mxu0 0
    %806 = vmatprep.subr.bf16.mxu0 0
    %807 = vmatpush1.bf16.msra.mxu0 0
    %808 = vmatprep.subr.bf16.mxu0 0
    %809 = vmatpush1.bf16.msra.mxu0 0
    %810 = vmatprep.subr.bf16.mxu0 0
    %811 = vmatpush1.bf16.msra.mxu0 0
    %812 = vmatprep.subr.bf16.mxu0 0
    %813 = vmatpush1.bf16.msra.mxu0 0
    %814 = vmatprep.mubr.bf16.mxu0 0
    %815 = vmatmul.mubr.bf16.gmra.mrb[0].mxu0 %v780
    %v816 = vpop.f32.mrb[0].mxu0
    %v817 = vadd.f32 0.0, %v816
    %v818 = vpop.f32.mrb[0].mxu0
    %v819 = vpop.f32.mrb[0].mxu0
    %v820 = vpop.f32.mrb[0].mxu0
    %821 = vdwg.mxu0
    %822 = vmatprep.subr.bf16.mxu0 0
    %823 = vmatpush1.bf16.msra.mxu0 %v106
    %824 = vmatprep.subr.bf16.mxu0 0
    %825 = vmatpush1.bf16.msra.mxu0 %v110
    %826 = vmatprep.subr.bf16.mxu0 0
    %827 = vmatpush1.bf16.msra.mxu0 0
    %828 = vmatprep.subr.bf16.mxu0 0
    %829 = vmatpush1.bf16.msra.mxu0 0
    %830 = vmatprep.subr.bf16.mxu0 0
    %831 = vmatpush1.bf16.msra.mxu0 0
    %832 = vmatprep.subr.bf16.mxu0 0
    %833 = vmatpush1.bf16.msra.mxu0 0
    %834 = vmatprep.subr.bf16.mxu0 0
    %835 = vmatpush1.bf16.msra.mxu0 0
    %836 = vmatprep.subr.bf16.mxu0 0
    %837 = vmatpush1.bf16.msra.mxu0 0
    %838 = vmatprep.subr.bf16.mxu0 0
    %839 = vmatpush1.bf16.msra.mxu0 0
    %840 = vmatprep.subr.bf16.mxu0 0
    %841 = vmatpush1.bf16.msra.mxu0 0
    %842 = vmatprep.subr.bf16.mxu0 0
    %843 = vmatpush1.bf16.msra.mxu0 0
    %844 = vmatprep.subr.bf16.mxu0 0
    %845 = vmatpush1.bf16.msra.mxu0 0
    %846 = vmatprep.subr.bf16.mxu0 0
    %847 = vmatpush1.bf16.msra.mxu0 0
    %848 = vmatprep.subr.bf16.mxu0 0
    %849 = vmatpush1.bf16.msra.mxu0 0
    %850 = vmatprep.subr.bf16.mxu0 0
    %851 = vmatpush1.bf16.msra.mxu0 0
    %852 = vmatprep.subr.bf16.mxu0 0
    %853 = vmatpush1.bf16.msra.mxu0 0
    %854 = vmatprep.mubr.bf16.mxu0 0
    %855 = vmatmul.mubr.bf16.gmra.mrb[0].mxu0 %v780
    %v856 = vpop.f32.mrb[0].mxu0
    %v857 = vadd.f32 %v817, %v856
    %v858 = vpop.f32.mrb[0].mxu0
    %v859 = vpop.f32.mrb[0].mxu0
    %v860 = vpop.f32.mrb[0].mxu0
    %861 = vdwg.mxu0
    %863 = vrot.lane.b32.xlu0 %v857, 112
    %v864 = vpop.permute.xlu0 %863
    %vm866 = vcmask 1042304
    %867 = vst.msk [vmem:[#allocation2] sm:$0x3] %vm866, %v864
    // Predicated region
    $region14: #{tpu_custom_call.1} parent=1 // pred_check
      _
    $region15: #{tpu_custom_call.1} parent=1 // pred_check_branch
      %869 = sbr.rel (0) target = $region17
    $region16: #{tpu_custom_call.1} parent=1 // pred_region
      %s871 = ssub.s32 32, 32
      %872 = vsyncadd [#allocation3], %s871
      %s874 = sshll.u32 [#allocation2], 4
      %s875 = int_to_ptr.vmem [resolvable:$true] %s874
      %877 = dma.vmem_to_hbm [thread:$0]  %s875, 32, %s3, [#allocation3]
    $region17: #{tpu_custom_call.1} parent=1 // pred_fallthru
      _
    // Predicated region
    $region18: #{tpu_custom_call.1} parent=1 // pred_check
      _
    $region19: #{tpu_custom_call.1} parent=1 // pred_check_branch
      %879 = sbr.rel (0) target = $region21
    $region20: #{tpu_custom_call.1} parent=1 // pred_region
      %880 = dma.done [#allocation3], 32
    $region21: #{tpu_custom_call.1} parent=1 // pred_fallthru
      _
    %881 = vsyncpa [#allocation3], 1

// kernel: tpu_custom_call.1
$region0: #{tpu_custom_call.1}
  #allocation0 [shape = 'u32[]', space=smem, size = 0x4, offset = 0x4, fixed_abs, tag = 'smem constant byte address 0x4 - core index']
  #allocation1 [shape = 'u32[144,128]{1,0:T(1,128)}', space=vmem, size = 0x12000, scoped, tag = 'internal scratch']
  %s0 = inlined_call_operand.vmem [shape: s32[2,16], index: 0, kind: input, shape index: {}]
  %s1 = inlined_call_operand.vmem [shape: bf16[30,16], index: 1, kind: input, shape index: {}]
  %s2 = inlined_call_operand.vmem [shape: bf16[30,16], index: 2, kind: input, shape index: {}]
  %s3 = inlined_call_operand.hbm [shape: f32[2,128], index: 3, kind: output, shape index: {}]
  %s4 = sld [smem:[#allocation0]]
  $region22: #{tpu_custom_call.1} parent=0
    _
  %s6 = ssub.s32 1, %s4
  %s7 = scalar_select 0, %s6, %s4
  $region1: #{tpu_custom_call.1} parent=0
    #allocation2 [shape = 'u8[1024]{0}', space=vmem, size = 0x400, scoped, tag = 'output window, operand 0, single buffered']
    #allocation3 [shape = 's32[1]{0}', space=sflag, size = 0x4, scoped, tag = 'scoped memory for tpu_custom_call.1']
    %8 = vsyncpa [#allocation3], 0
    // Predicated region
    $region2: #{tpu_custom_call.1} parent=1 // pred_check
      _
    $region3: #{tpu_custom_call.1} parent=1 // pred_check_branch
      %10 = sbr.rel (0) target = $region5
    $region4: #{tpu_custom_call.1} parent=1 // pred_region
      _
    $region5: #{tpu_custom_call.1} parent=1 // pred_fallthru
      _
    // Predicated region
    $region6: #{tpu_custom_call.1} parent=1 // pred_check
      _
    $region7: #{tpu_custom_call.1} parent=1 // pred_check_branch
      %12 = sbr.rel (0) target = $region9
    $region8: #{tpu_custom_call.1} parent=1 // pred_region
      _
    $region9: #{tpu_custom_call.1} parent=1 // pred_fallthru
      _
    // Predicated region
    $region10: #{tpu_custom_call.1} parent=1 // pred_check
      _
    $region11: #{tpu_custom_call.1} parent=1 // pred_check_branch
      %14 = sbr.rel (0) target = $region13
    $region12: #{tpu_custom_call.1} parent=1 // pred_region
      _
    $region13: #{tpu_custom_call.1} parent=1 // pred_fallthru
      _
    %v16 = vlaneseq
    %v17 = vand.u32 %v16, 127
    %v18 = vld [vmem:[%s1] sm:$0xf]
    %v19 = vld [vmem:[%s1 + $0x4] sm:$0xf]
    %v20 = vld [vmem:[%s1 + $0x8] sm:$0xf]
    %v21 = vld [vmem:[%s1 + $0xc] sm:$0x7]
    %v22 = vld [vmem:[%s2] sm:$0xf]
    %v23 = vld [vmem:[%s2 + $0x4] sm:$0xf]
    %v24 = vld [vmem:[%s2 + $0x8] sm:$0xf]
    %v25 = vld [vmem:[%s2 + $0xc] sm:$0x7]
    %v26 = vld [vmem:[%s0] sm:$0x3]
    %27 = vset.pattern.permute.xlu0 0
    %28 = vperm.xlu0 %27, %v26
    %v29 = vpop.permute.xlu0 %28
    %vm30 = vcmp.eq.s32.totalorder %v17, %v29
    %31 = vset.pattern.permute.xlu0 1
    %32 = vperm.xlu0 %31, %v26
    %v33 = vpop.permute.xlu0 %32
    %vm34 = vcmp.eq.s32.totalorder %v17, %v33
    %vm35 = vmor %vm30, %vm34
    %v36 = vsel %vm35, 1, 0
    %v37 = vcvt.s32.f32 %v36
    %v38 = vpack.c.bf16 %v37, %v37
    %v43 = vunpack.c.l.b16 %v22
    %v44 = vunpack.c.l.b16 %v23
    %v45 = vunpack.c.l.b16 %v24
    %v46 = vunpack.c.l.b16 %v25
    %v47 = vpack.c.b16 %v44, %v43
    %v48 = vpack.c.b16 %v46, %v45
    %vm50 = vcmask 244736
    %v52 = vsel %vm50, %v38, 0
    %vm54 = vcmask 1046528
    %v56 = vsel %vm54, %v48, 0
    %58 = vmatprep.subr.bf16.mxu0 0
    %59 = vmatpush1.bf16.msra.mxu0 %v47
    %60 = vmatprep.subr.bf16.mxu0 0
    %61 = vmatpush1.bf16.msra.mxu0 %v56
    %62 = vmatprep.subr.bf16.mxu0 0
    %63 = vmatpush1.bf16.msra.mxu0 0
    %64 = vmatprep.subr.bf16.mxu0 0
    %65 = vmatpush1.bf16.msra.mxu0 0
    %66 = vmatprep.subr.bf16.mxu0 0
    %67 = vmatpush1.bf16.msra.mxu0 0
    %68 = vmatprep.subr.bf16.mxu0 0
    %69 = vmatpush1.bf16.msra.mxu0 0
    %70 = vmatprep.subr.bf16.mxu0 0
    %71 = vmatpush1.bf16.msra.mxu0 0
    %72 = vmatprep.subr.bf16.mxu0 0
    %73 = vmatpush1.bf16.msra.mxu0 0
    %74 = vmatprep.subr.bf16.mxu0 0
    %75 = vmatpush1.bf16.msra.mxu0 0
    %76 = vmatprep.subr.bf16.mxu0 0
    %77 = vmatpush1.bf16.msra.mxu0 0
    %78 = vmatprep.subr.bf16.mxu0 0
    %79 = vmatpush1.bf16.msra.mxu0 0
    %80 = vmatprep.subr.bf16.mxu0 0
    %81 = vmatpush1.bf16.msra.mxu0 0
    %82 = vmatprep.subr.bf16.mxu0 0
    %83 = vmatpush1.bf16.msra.mxu0 0
    %84 = vmatprep.subr.bf16.mxu0 0
    %85 = vmatpush1.bf16.msra.mxu0 0
    %86 = vmatprep.subr.bf16.mxu0 0
    %87 = vmatpush1.bf16.msra.mxu0 0
    %88 = vmatprep.subr.bf16.mxu0 0
    %89 = vmatpush1.bf16.msra.mxu0 0
    %90 = vmatprep.mubr.bf16.mxu0 0
    %91 = vmatmul.mubr.bf16.gmra.mrb[0].mxu0 %v52
    %v92 = vpop.f32.mrb[0].mxu0
    %v93 = vadd.f32 0.0, %v92
    %v94 = vpop.f32.mrb[0].mxu0
    %v95 = vpop.f32.mrb[0].mxu0
    %v96 = vpop.f32.mrb[0].mxu0
    %97 = vdwg.mxu0
    %v102 = vunpack.c.l.b16 %v18
    %v103 = vunpack.c.l.b16 %v19
    %v104 = vunpack.c.l.b16 %v20
    %v105 = vunpack.c.l.b16 %v21
    %v106 = vpack.c.b16 %v103, %v102
    %v107 = vpack.c.b16 %v105, %v104
    %v110 = vsel %vm54, %v107, 0
    %112 = vmatprep.subr.bf16.mxu0 0
    %113 = vmatpush1.bf16.msra.mxu0 %v106
    %114 = vmatprep.subr.bf16.mxu0 0
    %115 = vmatpush1.bf16.msra.mxu0 %v110
    %116 = vmatprep.subr.bf16.mxu0 0
    %117 = vmatpush1.bf16.msra.mxu0 0
    %118 = vmatprep.subr.bf16.mxu0 0
    %119 = vmatpush1.bf16.msra.mxu0 0
    %120 = vmatprep.subr.bf16.mxu0 0
    %121 = vmatpush1.bf16.msra.mxu0 0
    %122 = vmatprep.subr.bf16.mxu0 0
    %123 = vmatpush1.bf16.msra.mxu0 0
    %124 = vmatprep.subr.bf16.mxu0 0
    %125 = vmatpush1.bf16.msra.mxu0 0
    %126 = vmatprep.subr.bf16.mxu0 0
    %127 = vmatpush1.bf16.msra.mxu0 0
    %128 = vmatprep.subr.bf16.mxu0 0
    %129 = vmatpush1.bf16.msra.mxu0 0
    %130 = vmatprep.subr.bf16.mxu0 0
    %131 = vmatpush1.bf16.msra.mxu0 0
    %132 = vmatprep.subr.bf16.mxu0 0
    %133 = vmatpush1.bf16.msra.mxu0 0
    %134 = vmatprep.subr.bf16.mxu0 0
    %135 = vmatpush1.bf16.msra.mxu0 0
    %136 = vmatprep.subr.bf16.mxu0 0
    %137 = vmatpush1.bf16.msra.mxu0 0
    %138 = vmatprep.subr.bf16.mxu0 0
    %139 = vmatpush1.bf16.msra.mxu0 0
    %140 = vmatprep.subr.bf16.mxu0 0
    %141 = vmatpush1.bf16.msra.mxu0 0
    %142 = vmatprep.subr.bf16.mxu0 0
    %143 = vmatpush1.bf16.msra.mxu0 0
    %144 = vmatprep.mubr.bf16.mxu0 0
    %145 = vmatmul.mubr.bf16.gmra.mrb[0].mxu0 %v52
    %v146 = vpop.f32.mrb[0].mxu0
    %v147 = vadd.f32 %v93, %v146
    %v148 = vpop.f32.mrb[0].mxu0
    %v149 = vpop.f32.mrb[0].mxu0
    %v150 = vpop.f32.mrb[0].mxu0
    %151 = vdwg.mxu0
    %vm152 = vcmask 123904
    %153 = vst.msk [vmem:[#allocation2] sm:$0x3] %vm152, %v147
    %v154 = vld [vmem:[%s0] sm:$0x3]
    %155 = vset.pattern.permute.xlu0 2
    %156 = vperm.xlu0 %155, %v154
    %v157 = vpop.permute.xlu0 %156
    %vm158 = vcmp.eq.s32.totalorder %v17, %v157
    %159 = vset.pattern.permute.xlu0 3
    %160 = vperm.xlu0 %159, %v154
    %v161 = vpop.permute.xlu0 %160
    %vm162 = vcmp.eq.s32.totalorder %v17, %v161
    %vm163 = vmor %vm158, %vm162
    %v164 = vsel %vm163, 1, 0
    %v165 = vcvt.s32.f32 %v164
    %v166 = vpack.c.bf16 %v165, %v165
    %v168 = vsel %vm50, %v166, 0
    %170 = vmatprep.subr.bf16.mxu0 0
    %171 = vmatpush1.bf16.msra.mxu0 %v47
    %172 = vmatprep.subr.bf16.mxu0 0
    %173 = vmatpush1.bf16.msra.mxu0 %v56
    %174 = vmatprep.subr.bf16.mxu0 0
    %175 = vmatpush1.bf16.msra.mxu0 0
    %176 = vmatprep.subr.bf16.mxu0 0
    %177 = vmatpush1.bf16.msra.mxu0 0
    %178 = vmatprep.subr.bf16.mxu0 0
    %179 = vmatpush1.bf16.msra.mxu0 0
    %180 = vmatprep.subr.bf16.mxu0 0
    %181 = vmatpush1.bf16.msra.mxu0 0
    %182 = vmatprep.subr.bf16.mxu0 0
    %183 = vmatpush1.bf16.msra.mxu0 0
    %184 = vmatprep.subr.bf16.mxu0 0
    %185 = vmatpush1.bf16.msra.mxu0 0
    %186 = vmatprep.subr.bf16.mxu0 0
    %187 = vmatpush1.bf16.msra.mxu0 0
    %188 = vmatprep.subr.bf16.mxu0 0
    %189 = vmatpush1.bf16.msra.mxu0 0
    %190 = vmatprep.subr.bf16.mxu0 0
    %191 = vmatpush1.bf16.msra.mxu0 0
    %192 = vmatprep.subr.bf16.mxu0 0
    %193 = vmatpush1.bf16.msra.mxu0 0
    %194 = vmatprep.subr.bf16.mxu0 0
    %195 = vmatpush1.bf16.msra.mxu0 0
    %196 = vmatprep.subr.bf16.mxu0 0
    %197 = vmatpush1.bf16.msra.mxu0 0
    %198 = vmatprep.subr.bf16.mxu0 0
    %199 = vmatpush1.bf16.msra.mxu0 0
    %200 = vmatprep.subr.bf16.mxu0 0
    %201 = vmatpush1.bf16.msra.mxu0 0
    %202 = vmatprep.mubr.bf16.mxu0 0
    %203 = vmatmul.mubr.bf16.gmra.mrb[0].mxu0 %v168
    %v204 = vpop.f32.mrb[0].mxu0
    %v205 = vadd.f32 0.0, %v204
    %v206 = vpop.f32.mrb[0].mxu0
    %v207 = vpop.f32.mrb[0].mxu0
    %v208 = vpop.f32.mrb[0].mxu0
    %209 = vdwg.mxu0
    %210 = vmatprep.subr.bf16.mxu0 0
    %211 = vmatpush1.bf16.msra.mxu0 %v106
    %212 = vmatprep.subr.bf16.mxu0 0
    %213 = vmatpush1.bf16.msra.mxu0 %v110
    %214 = vmatprep.subr.bf16.mxu0 0
    %215 = vmatpush1.bf16.msra.mxu0 0
    %216 = vmatprep.subr.bf16.mxu0 0
    %217 = vmatpush1.bf16.msra.mxu0 0
    %218 = vmatprep.subr.bf16.mxu0 0
    %219 = vmatpush1.bf16.msra.mxu0 0
    %220 = vmatprep.subr.bf16.mxu0 0
    %221 = vmatpush1.bf16.msra.mxu0 0
    %222 = vmatprep.subr.bf16.mxu0 0
    %223 = vmatpush1.bf16.msra.mxu0 0
    %224 = vmatprep.subr.bf16.mxu0 0
    %225 = vmatpush1.bf16.msra.mxu0 0
    %226 = vmatprep.subr.bf16.mxu0 0
    %227 = vmatpush1.bf16.msra.mxu0 0
    %228 = vmatprep.subr.bf16.mxu0 0
    %229 = vmatpush1.bf16.msra.mxu0 0
    %230 = vmatprep.subr.bf16.mxu0 0
    %231 = vmatpush1.bf16.msra.mxu0 0
    %232 = vmatprep.subr.bf16.mxu0 0
    %233 = vmatpush1.bf16.msra.mxu0 0
    %234 = vmatprep.subr.bf16.mxu0 0
    %235 = vmatpush1.bf16.msra.mxu0 0
    %236 = vmatprep.subr.bf16.mxu0 0
    %237 = vmatpush1.bf16.msra.mxu0 0
    %238 = vmatprep.subr.bf16.mxu0 0
    %239 = vmatpush1.bf16.msra.mxu0 0
    %240 = vmatprep.subr.bf16.mxu0 0
    %241 = vmatpush1.bf16.msra.mxu0 0
    %242 = vmatprep.mubr.bf16.mxu0 0
    %243 = vmatmul.mubr.bf16.gmra.mrb[0].mxu0 %v168
    %v244 = vpop.f32.mrb[0].mxu0
    %v245 = vadd.f32 %v205, %v244
    %v246 = vpop.f32.mrb[0].mxu0
    %v247 = vpop.f32.mrb[0].mxu0
    %v248 = vpop.f32.mrb[0].mxu0
    %249 = vdwg.mxu0
    %251 = vrot.lane.b32.xlu0 %v245, 16
    %v252 = vpop.permute.xlu0 %251
    %vm254 = vcmask 255104
    %255 = vst.msk [vmem:[#allocation2] sm:$0x3] %vm254, %v252
    %v256 = vld [vmem:[%s0] sm:$0x3]
    %257 = vset.pattern.permute.xlu0 4
    %258 = vperm.xlu0 %257, %v256
    %v259 = vpop.permute.xlu0 %258
    %vm260 = vcmp.eq.s32.totalorder %v17, %v259
    %261 = vset.pattern.permute.xlu0 5
    %262 = vperm.xlu0 %261, %v256
    %v263 = vpop.permute.xlu0 %262
    %vm264 = vcmp.eq.s32.totalorder %v17, %v263
    %vm265 = vmor %vm260, %vm264
    %v266 = vsel %vm265, 1, 0
    %v267 = vcvt.s32.f32 %v266
    %v268 = vpack.c.bf16 %v267, %v267
    %v270 = vsel %vm50, %v268, 0
    %272 = vmatprep.subr.bf16.mxu0 0
    %273 = vmatpush1.bf16.msra.mxu0 %v47
    %274 = vmatprep.subr.bf16.mxu0 0
    %275 = vmatpush1.bf16.msra.mxu0 %v56
    %276 = vmatprep.subr.bf16.mxu0 0
    %277 = vmatpush1.bf16.msra.mxu0 0
    %278 = vmatprep.subr.bf16.mxu0 0
    %279 = vmatpush1.bf16.msra.mxu0 0
    %280 = vmatprep.subr.bf16.mxu0 0
    %281 = vmatpush1.bf16.msra.mxu0 0
    %282 = vmatprep.subr.bf16.mxu0 0
    %283 = vmatpush1.bf16.msra.mxu0 0
    %284 = vmatprep.subr.bf16.mxu0 0
    %285 = vmatpush1.bf16.msra.mxu0 0
    %286 = vmatprep.subr.bf16.mxu0 0
    %287 = vmatpush1.bf16.msra.mxu0 0
    %288 = vmatprep.subr.bf16.mxu0 0
    %289 = vmatpush1.bf16.msra.mxu0 0
    %290 = vmatprep.subr.bf16.mxu0 0
    %291 = vmatpush1.bf16.msra.mxu0 0
    %292 = vmatprep.subr.bf16.mxu0 0
    %293 = vmatpush1.bf16.msra.mxu0 0
    %294 = vmatprep.subr.bf16.mxu0 0
    %295 = vmatpush1.bf16.msra.mxu0 0
    %296 = vmatprep.subr.bf16.mxu0 0
    %297 = vmatpush1.bf16.msra.mxu0 0
    %298 = vmatprep.subr.bf16.mxu0 0
    %299 = vmatpush1.bf16.msra.mxu0 0
    %300 = vmatprep.subr.bf16.mxu0 0
    %301 = vmatpush1.bf16.msra.mxu0 0
    %302 = vmatprep.subr.bf16.mxu0 0
    %303 = vmatpush1.bf16.msra.mxu0 0
    %304 = vmatprep.mubr.bf16.mxu0 0
    %305 = vmatmul.mubr.bf16.gmra.mrb[0].mxu0 %v270
    %v306 = vpop.f32.mrb[0].mxu0
    %v307 = vadd.f32 0.0, %v306
    %v308 = vpop.f32.mrb[0].mxu0
    %v309 = vpop.f32.mrb[0].mxu0
    %v310 = vpop.f32.mrb[0].mxu0
    %311 = vdwg.mxu0
    %312 = vmatprep.subr.bf16.mxu0 0
    %313 = vmatpush1.bf16.msra.mxu0 %v106
    %314 = vmatprep.subr.bf16.mxu0 0
    %315 = vmatpush1.bf16.msra.mxu0 %v110
    %316 = vmatprep.subr.bf16.mxu0 0
    %317 = vmatpush1.bf16.msra.mxu0 0
    %318 = vmatprep.subr.bf16.mxu0 0
    %319 = vmatpush1.bf16.msra.mxu0 0
    %320 = vmatprep.subr.bf16.mxu0 0
    %321 = vmatpush1.bf16.msra.mxu0 0
    %322 = vmatprep.subr.bf16.mxu0 0
    %323 = vmatpush1.bf16.msra.mxu0 0
    %324 = vmatprep.subr.bf16.mxu0 0
    %325 = vmatpush1.bf16.msra.mxu0 0
    %326 = vmatprep.subr.bf16.mxu0 0
    %327 = vmatpush1.bf16.msra.mxu0 0
    %328 = vmatprep.subr.bf16.mxu0 0
    %329 = vmatpush1.bf16.msra.mxu0 0
    %330 = vmatprep.subr.bf16.mxu0 0
    %331 = vmatpush1.bf16.msra.mxu0 0
    %332 = vmatprep.subr.bf16.mxu0 0
    %333 = vmatpush1.bf16.msra.mxu0 0
    %334 = vmatprep.subr.bf16.mxu0 0
    %335 = vmatpush1.bf16.msra.mxu0 0
    %336 = vmatprep.subr.bf16.mxu0 0
    %337 = vmatpush1.bf16.msra.mxu0 0
    %338 = vmatprep.subr.bf16.mxu0 0
    %339 = vmatpush1.bf16.msra.mxu0 0
    %340 = vmatprep.subr.bf16.mxu0 0
    %341 = vmatpush1.bf16.msra.mxu0 0
    %342 = vmatprep.subr.bf16.mxu0 0
    %343 = vmatpush1.bf16.msra.mxu0 0
    %344 = vmatprep.mubr.bf16.mxu0 0
    %345 = vmatmul.mubr.bf16.gmra.mrb[0].mxu0 %v270
    %v346 = vpop.f32.mrb[0].mxu0
    %v347 = vadd.f32 %v307, %v346
    %v348 = vpop.f32.mrb[0].mxu0
    %v349 = vpop.f32.mrb[0].mxu0
    %v350 = vpop.f32.mrb[0].mxu0
    %351 = vdwg.mxu0
    %353 = vrot.lane.b32.xlu0 %v347, 32
    %v354 = vpop.permute.xlu0 %353
    %vm356 = vcmask 386304
    %357 = vst.msk [vmem:[#allocation2] sm:$0x3] %vm356, %v354
    %v358 = vld [vmem:[%s0] sm:$0x3]
    %359 = vset.pattern.permute.xlu0 6
    %360 = vperm.xlu0 %359, %v358
    %v361 = vpop.permute.xlu0 %360
    %vm362 = vcmp.eq.s32.totalorder %v17, %v361
    %363 = vset.pattern.permute.xlu0 7
    %364 = vperm.xlu0 %363, %v358
    %v365 = vpop.permute.xlu0 %364
    %vm366 = vcmp.eq.s32.totalorder %v17, %v365
    %vm367 = vmor %vm362, %vm366
    %v368 = vsel %vm367, 1, 0
    %v369 = vcvt.s32.f32 %v368
    %v370 = vpack.c.bf16 %v369, %v369
    %v372 = vsel %vm50, %v370, 0
    %374 = vmatprep.subr.bf16.mxu0 0
    %375 = vmatpush1.bf16.msra.mxu0 %v47
    %376 = vmatprep.subr.bf16.mxu0 0
    %377 = vmatpush1.bf16.msra.mxu0 %v56
    %378 = vmatprep.subr.bf16.mxu0 0
    %379 = vmatpush1.bf16.msra.mxu0 0
    %380 = vmatprep.subr.bf16.mxu0 0
    %381 = vmatpush1.bf16.msra.mxu0 0
    %382 = vmatprep.subr.bf16.mxu0 0
    %383 = vmatpush1.bf16.msra.mxu0 0
    %384 = vmatprep.subr.bf16.mxu0 0
    %385 = vmatpush1.bf16.msra.mxu0 0
    %386 = vmatprep.subr.bf16.mxu0 0
    %387 = vmatpush1.bf16.msra.mxu0 0
    %388 = vmatprep.subr.bf16.mxu0 0
    %389 = vmatpush1.bf16.msra.mxu0 0
    %390 = vmatprep.subr.bf16.mxu0 0
    %391 = vmatpush1.bf16.msra.mxu0 0
    %392 = vmatprep.subr.bf16.mxu0 0
    %393 = vmatpush1.bf16.msra.mxu0 0
    %394 = vmatprep.subr.bf16.mxu0 0
    %395 = vmatpush1.bf16.msra.mxu0 0
    %396 = vmatprep.subr.bf16.mxu0 0
    %397 = vmatpush1.bf16.msra.mxu0 0
    %398 = vmatprep.subr.bf16.mxu0 0
    %399 = vmatpush1.bf16.msra.mxu0 0
    %400 = vmatprep.subr.bf16.mxu0 0
    %401 = vmatpush1.bf16.msra.mxu0 0
    %402 = vmatprep.subr.bf16.mxu0 0
    %403 = vmatpush1.bf16.msra.mxu0 0
    %404 = vmatprep.subr.bf16.mxu0 0
    %405 = vmatpush1.bf16.msra.mxu0 0
    %406 = vmatprep.mubr.bf16.mxu0 0
    %407 = vmatmul.mubr.bf16.gmra.mrb[0].mxu0 %v372
    %v408 = vpop.f32.mrb[0].mxu0
    %v409 = vadd.f32 0.0, %v408
    %v410 = vpop.f32.mrb[0].mxu0
    %v411 = vpop.f32.mrb[0].mxu0
    %v412 = vpop.f32.mrb[0].mxu0
    %413 = vdwg.mxu0
    %414 = vmatprep.subr.bf16.mxu0 0
    %415 = vmatpush1.bf16.msra.mxu0 %v106
    %416 = vmatprep.subr.bf16.mxu0 0
    %417 = vmatpush1.bf16.msra.mxu0 %v110
    %418 = vmatprep.subr.bf16.mxu0 0
    %419 = vmatpush1.bf16.msra.mxu0 0
    %420 = vmatprep.subr.bf16.mxu0 0
    %421 = vmatpush1.bf16.msra.mxu0 0
    %422 = vmatprep.subr.bf16.mxu0 0
    %423 = vmatpush1.bf16.msra.mxu0 0
    %424 = vmatprep.subr.bf16.mxu0 0
    %425 = vmatpush1.bf16.msra.mxu0 0
    %426 = vmatprep.subr.bf16.mxu0 0
    %427 = vmatpush1.bf16.msra.mxu0 0
    %428 = vmatprep.subr.bf16.mxu0 0
    %429 = vmatpush1.bf16.msra.mxu0 0
    %430 = vmatprep.subr.bf16.mxu0 0
    %431 = vmatpush1.bf16.msra.mxu0 0
    %432 = vmatprep.subr.bf16.mxu0 0
    %433 = vmatpush1.bf16.msra.mxu0 0
    %434 = vmatprep.subr.bf16.mxu0 0
    %435 = vmatpush1.bf16.msra.mxu0 0
    %436 = vmatprep.subr.bf16.mxu0 0
    %437 = vmatpush1.bf16.msra.mxu0 0
    %438 = vmatprep.subr.bf16.mxu0 0
    %439 = vmatpush1.bf16.msra.mxu0 0
    %440 = vmatprep.subr.bf16.mxu0 0
    %441 = vmatpush1.bf16.msra.mxu0 0
    %442 = vmatprep.subr.bf16.mxu0 0
    %443 = vmatpush1.bf16.msra.mxu0 0
    %444 = vmatprep.subr.bf16.mxu0 0
    %445 = vmatpush1.bf16.msra.mxu0 0
    %446 = vmatprep.mubr.bf16.mxu0 0
    %447 = vmatmul.mubr.bf16.gmra.mrb[0].mxu0 %v372
    %v448 = vpop.f32.mrb[0].mxu0
    %v449 = vadd.f32 %v409, %v448
    %v450 = vpop.f32.mrb[0].mxu0
    %v451 = vpop.f32.mrb[0].mxu0
    %v452 = vpop.f32.mrb[0].mxu0
    %453 = vdwg.mxu0
    %455 = vrot.lane.b32.xlu0 %v449, 48
    %v456 = vpop.permute.xlu0 %455
    %vm458 = vcmask 517504
    %459 = vst.msk [vmem:[#allocation2] sm:$0x3] %vm458, %v456
    %v460 = vld [vmem:[%s0] sm:$0x3]
    %461 = vset.pattern.permute.xlu0 8
    %462 = vperm.xlu0 %461, %v460
    %v463 = vpop.permute.xlu0 %462
    %vm464 = vcmp.eq.s32.totalorder %v17, %v463
    %465 = vset.pattern.permute.xlu0 9
    %466 = vperm.xlu0 %465, %v460
    %v467 = vpop.permute.xlu0 %466
    %vm468 = vcmp.eq.s32.totalorder %v17, %v467
    %vm469 = vmor %vm464, %vm468
    %v470 = vsel %vm469, 1, 0
    %v471 = vcvt.s32.f32 %v470
    %v472 = vpack.c.bf16 %v471, %v471
    %v474 = vsel %vm50, %v472, 0
    %476 = vmatprep.subr.bf16.mxu0 0
    %477 = vmatpush1.bf16.msra.mxu0 %v47
    %478 = vmatprep.subr.bf16.mxu0 0
    %479 = vmatpush1.bf16.msra.mxu0 %v56
    %480 = vmatprep.subr.bf16.mxu0 0
    %481 = vmatpush1.bf16.msra.mxu0 0
    %482 = vmatprep.subr.bf16.mxu0 0
    %483 = vmatpush1.bf16.msra.mxu0 0
    %484 = vmatprep.subr.bf16.mxu0 0
    %485 = vmatpush1.bf16.msra.mxu0 0
    %486 = vmatprep.subr.bf16.mxu0 0
    %487 = vmatpush1.bf16.msra.mxu0 0
    %488 = vmatprep.subr.bf16.mxu0 0
    %489 = vmatpush1.bf16.msra.mxu0 0
    %490 = vmatprep.subr.bf16.mxu0 0
    %491 = vmatpush1.bf16.msra.mxu0 0
    %492 = vmatprep.subr.bf16.mxu0 0
    %493 = vmatpush1.bf16.msra.mxu0 0
    %494 = vmatprep.subr.bf16.mxu0 0
    %495 = vmatpush1.bf16.msra.mxu0 0
    %496 = vmatprep.subr.bf16.mxu0 0
    %497 = vmatpush1.bf16.msra.mxu0 0
    %498 = vmatprep.subr.bf16.mxu0 0
    %499 = vmatpush1.bf16.msra.mxu0 0
    %500 = vmatprep.subr.bf16.mxu0 0
    %501 = vmatpush1.bf16.msra.mxu0 0
    %502 = vmatprep.subr.bf16.mxu0 0
    %503 = vmatpush1.bf16.msra.mxu0 0
    %504 = vmatprep.subr.bf16.mxu0 0
    %505 = vmatpush1.bf16.msra.mxu0 0
    %506 = vmatprep.subr.bf16.mxu0 0
    %507 = vmatpush1.bf16.msra.mxu0 0
    %508 = vmatprep.mubr.bf16.mxu0 0
    %509 = vmatmul.mubr.bf16.gmra.mrb[0].mxu0 %v474
    %v510 = vpop.f32.mrb[0].mxu0
    %v511 = vadd.f32 0.0, %v510
    %v512 = vpop.f32.mrb[0].mxu0
    %v513 = vpop.f32.mrb[0].mxu0
    %v514 = vpop.f32.mrb[0].mxu0
    %515 = vdwg.mxu0
    %516 = vmatprep.subr.bf16.mxu0 0
    %517 = vmatpush1.bf16.msra.mxu0 %v106
    %518 = vmatprep.subr.bf16.mxu0 0
    %519 = vmatpush1.bf16.msra.mxu0 %v110
    %520 = vmatprep.subr.bf16.mxu0 0
    %521 = vmatpush1.bf16.msra.mxu0 0
    %522 = vmatprep.subr.bf16.mxu0 0
    %523 = vmatpush1.bf16.msra.mxu0 0
    %524 = vmatprep.subr.bf16.mxu0 0
    %525 = vmatpush1.bf16.msra.mxu0 0
    %526 = vmatprep.subr.bf16.mxu0 0
    %527 = vmatpush1.bf16.msra.mxu0 0
    %528 = vmatprep.subr.bf16.mxu0 0
    %529 = vmatpush1.bf16.msra.mxu0 0
    %530 = vmatprep.subr.bf16.mxu0 0
    %531 = vmatpush1.bf16.msra.mxu0 0
    %532 = vmatprep.subr.bf16.mxu0 0
    %533 = vmatpush1.bf16.msra.mxu0 0
    %534 = vmatprep.subr.bf16.mxu0 0
    %535 = vmatpush1.bf16.msra.mxu0 0
    %536 = vmatprep.subr.bf16.mxu0 0
    %537 = vmatpush1.bf16.msra.mxu0 0
    %538 = vmatprep.subr.bf16.mxu0 0
    %539 = vmatpush1.bf16.msra.mxu0 0
    %540 = vmatprep.subr.bf16.mxu0 0
    %541 = vmatpush1.bf16.msra.mxu0 0
    %542 = vmatprep.subr.bf16.mxu0 0
    %543 = vmatpush1.bf16.msra.mxu0 0
    %544 = vmatprep.subr.bf16.mxu0 0
    %545 = vmatpush1.bf16.msra.mxu0 0
    %546 = vmatprep.subr.bf16.mxu0 0
    %547 = vmatpush1.bf16.msra.mxu0 0
    %548 = vmatprep.mubr.bf16.mxu0 0
    %549 = vmatmul.mubr.bf16.gmra.mrb[0].mxu0 %v474
    %v550 = vpop.f32.mrb[0].mxu0
    %v551 = vadd.f32 %v511, %v550
    %v552 = vpop.f32.mrb[0].mxu0
    %v553 = vpop.f32.mrb[0].mxu0
    %v554 = vpop.f32.mrb[0].mxu0
    %555 = vdwg.mxu0
    %557 = vrot.lane.b32.xlu0 %v551, 64
    %v558 = vpop.permute.xlu0 %557
    %vm560 = vcmask 648704
    %561 = vst.msk [vmem:[#allocation2] sm:$0x3] %vm560, %v558
    %v562 = vld [vmem:[%s0] sm:$0x3]
    %563 = vset.pattern.permute.xlu0 10
    %564 = vperm.xlu0 %563, %v562
    %v565 = vpop.permute.xlu0 %564
    %vm566 = vcmp.eq.s32.totalorder %v17, %v565
    %567 = vset.pattern.permute.xlu0 11
    %568 = vperm.xlu0 %567, %v562
    %v569 = vpop.permute.xlu0 %568
    %vm570 = vcmp.eq.s32.totalorder %v17, %v569
    %vm571 = vmor %vm566, %vm570
    %v572 = vsel %vm571, 1, 0
    %v573 = vcvt.s32.f32 %v572
    %v574 = vpack.c.bf16 %v573, %v573
    %v576 = vsel %vm50, %v574, 0
    %578 = vmatprep.subr.bf16.mxu0 0
    %579 = vmatpush1.bf16.msra.mxu0 %v47
    %580 = vmatprep.subr.bf16.mxu0 0
    %581 = vmatpush1.bf16.msra.mxu0 %v56
    %582 = vmatprep.subr.bf16.mxu0 0
    %583 = vmatpush1.bf16.msra.mxu0 0
    %584 = vmatprep.subr.bf16.mxu0 0
    %585 = vmatpush1.bf16.msra.mxu0 0
    %586 = vmatprep.subr.bf16.mxu0 0
    %587 = vmatpush1.bf16.msra.mxu0 0
    %588 = vmatprep.subr.bf16.mxu0 0
    %589 = vmatpush1.bf16.msra.mxu0 0
    %590 = vmatprep.subr.bf16.mxu0 0
    %591 = vmatpush1.bf16.msra.mxu0 0
    %592 = vmatprep.subr.bf16.mxu0 0
    %593 = vmatpush1.bf16.msra.mxu0 0
    %594 = vmatprep.subr.bf16.mxu0 0
    %595 = vmatpush1.bf16.msra.mxu0 0
    %596 = vmatprep.subr.bf16.mxu0 0
    %597 = vmatpush1.bf16.msra.mxu0 0
    %598 = vmatprep.subr.bf16.mxu0 0
    %599 = vmatpush1.bf16.msra.mxu0 0
    %600 = vmatprep.subr.bf16.mxu0 0
    %601 = vmatpush1.bf16.msra.mxu0 0
    %602 = vmatprep.subr.bf16.mxu0 0
    %603 = vmatpush1.bf16.msra.mxu0 0
    %604 = vmatprep.subr.bf16.mxu0 0
    %605 = vmatpush1.bf16.msra.mxu0 0
    %606 = vmatprep.subr.bf16.mxu0 0
    %607 = vmatpush1.bf16.msra.mxu0 0
    %608 = vmatprep.subr.bf16.mxu0 0
    %609 = vmatpush1.bf16.msra.mxu0 0
    %610 = vmatprep.mubr.bf16.mxu0 0
    %611 = vmatmul.mubr.bf16.gmra.mrb[0].mxu0 %v576
    %v612 = vpop.f32.mrb[0].mxu0
    %v613 = vadd.f32 0.0, %v612
    %v614 = vpop.f32.mrb[0].mxu0
    %v615 = vpop.f32.mrb[0].mxu0
    %v616 = vpop.f32.mrb[0].mxu0
    %617 = vdwg.mxu0
    %618 = vmatprep.subr.bf16.mxu0 0
    %619 = vmatpush1.bf16.msra.mxu0 %v106
    %620 = vmatprep.subr.bf16.mxu0 0
    %621 = vmatpush1.bf16.msra.mxu0 %v110
    %622 = vmatprep.subr.bf16.mxu0 0
    %623 = vmatpush1.bf16.msra.mxu0 0
    %624 = vmatprep.subr.bf16.mxu0 0
    %625 = vmatpush1.bf16.msra.mxu0 0
    %626 = vmatprep.subr.bf16.mxu0 0
    %627 = vmatpush1.bf16.msra.mxu0 0
    %628 = vmatprep.subr.bf16.mxu0 0
    %629 = vmatpush1.bf16.msra.mxu0 0
    %630 = vmatprep.subr.bf16.mxu0 0
    %631 = vmatpush1.bf16.msra.mxu0 0
    %632 = vmatprep.subr.bf16.mxu0 0
    %633 = vmatpush1.bf16.msra.mxu0 0
    %634 = vmatprep.subr.bf16.mxu0 0
    %635 = vmatpush1.bf16.msra.mxu0 0
    %636 = vmatprep.subr.bf16.mxu0 0
    %637 = vmatpush1.bf16.msra.mxu0 0
    %638 = vmatprep.subr.bf16.mxu0 0
    %639 = vmatpush1.bf16.msra.mxu0 0
    %640 = vmatprep.subr.bf16.mxu0 0
    %641 = vmatpush1.bf16.msra.mxu0 0
    %642 = vmatprep.subr.bf16.mxu0 0
    %643 = vmatpush1.bf16.msra.mxu0 0
    %644 = vmatprep.subr.bf16.mxu0 0
    %645 = vmatpush1.bf16.msra.mxu0 0
    %646 = vmatprep.subr.bf16.mxu0 0
    %647 = vmatpush1.bf16.msra.mxu0 0
    %648 = vmatprep.subr.bf16.mxu0 0
    %649 = vmatpush1.bf16.msra.mxu0 0
    %650 = vmatprep.mubr.bf16.mxu0 0
    %651 = vmatmul.mubr.bf16.gmra.mrb[0].mxu0 %v576
    %v652 = vpop.f32.mrb[0].mxu0
    %v653 = vadd.f32 %v613, %v652
    %v654 = vpop.f32.mrb[0].mxu0
    %v655 = vpop.f32.mrb[0].mxu0
    %v656 = vpop.f32.mrb[0].mxu0
    %657 = vdwg.mxu0
    %659 = vrot.lane.b32.xlu0 %v653, 80
    %v660 = vpop.permute.xlu0 %659
    %vm662 = vcmask 779904
    %663 = vst.msk [vmem:[#allocation2] sm:$0x3] %vm662, %v660
    %v664 = vld [vmem:[%s0] sm:$0x3]
    %665 = vset.pattern.permute.xlu0 12
    %666 = vperm.xlu0 %665, %v664
    %v667 = vpop.permute.xlu0 %666
    %vm668 = vcmp.eq.s32.totalorder %v17, %v667
    %669 = vset.pattern.permute.xlu0 13
    %670 = vperm.xlu0 %669, %v664
    %v671 = vpop.permute.xlu0 %670
    %vm672 = vcmp.eq.s32.totalorder %v17, %v671
    %vm673 = vmor %vm668, %vm672
    %v674 = vsel %vm673, 1, 0
    %v675 = vcvt.s32.f32 %v674
    %v676 = vpack.c.bf16 %v675, %v675
    %v678 = vsel %vm50, %v676, 0
    %680 = vmatprep.subr.bf16.mxu0 0
    %681 = vmatpush1.bf16.msra.mxu0 %v47
    %682 = vmatprep.subr.bf16.mxu0 0
    %683 = vmatpush1.bf16.msra.mxu0 %v56
    %684 = vmatprep.subr.bf16.mxu0 0
    %685 = vmatpush1.bf16.msra.mxu0 0
    %686 = vmatprep.subr.bf16.mxu0 0
    %687 = vmatpush1.bf16.msra.mxu0 0
    %688 = vmatprep.subr.bf16.mxu0 0
    %689 = vmatpush1.bf16.msra.mxu0 0
    %690 = vmatprep.subr.bf16.mxu0 0
    %691 = vmatpush1.bf16.msra.mxu0 0
    %692 = vmatprep.subr.bf16.mxu0 0
    %693 = vmatpush1.bf16.msra.mxu0 0
    %694 = vmatprep.subr.bf16.mxu0 0
    %695 = vmatpush1.bf16.msra.mxu0 0
    %696 = vmatprep.subr.bf16.mxu0 0
    %697 = vmatpush1.bf16.msra.mxu0 0
    %698 = vmatprep.subr.bf16.mxu0 0
    %699 = vmatpush1.bf16.msra.mxu0 0
    %700 = vmatprep.subr.bf16.mxu0 0
    %701 = vmatpush1.bf16.msra.mxu0 0
    %702 = vmatprep.subr.bf16.mxu0 0
    %703 = vmatpush1.bf16.msra.mxu0 0
    %704 = vmatprep.subr.bf16.mxu0 0
    %705 = vmatpush1.bf16.msra.mxu0 0
    %706 = vmatprep.subr.bf16.mxu0 0
    %707 = vmatpush1.bf16.msra.mxu0 0
    %708 = vmatprep.subr.bf16.mxu0 0
    %709 = vmatpush1.bf16.msra.mxu0 0
    %710 = vmatprep.subr.bf16.mxu0 0
    %711 = vmatpush1.bf16.msra.mxu0 0
    %712 = vmatprep.mubr.bf16.mxu0 0
    %713 = vmatmul.mubr.bf16.gmra.mrb[0].mxu0 %v678
    %v714 = vpop.f32.mrb[0].mxu0
    %v715 = vadd.f32 0.0, %v714
    %v716 = vpop.f32.mrb[0].mxu0
    %v717 = vpop.f32.mrb[0].mxu0
    %v718 = vpop.f32.mrb[0].mxu0
    %719 = vdwg.mxu0
    %720 = vmatprep.subr.bf16.mxu0 0
    %721 = vmatpush1.bf16.msra.mxu0 %v106
    %722 = vmatprep.subr.bf16.mxu0 0
    %723 = vmatpush1.bf16.msra.mxu0 %v110
    %724 = vmatprep.subr.bf16.mxu0 0
    %725 = vmatpush1.bf16.msra.mxu0 0
    %726 = vmatprep.subr.bf16.mxu0 0
    %727 = vmatpush1.bf16.msra.mxu0 0
    %728 = vmatprep.subr.bf16.mxu0 0
    %729 = vmatpush1.bf16.msra.mxu0 0
    %730 = vmatprep.subr.bf16.mxu0 0
    %731 = vmatpush1.bf16.msra.mxu0 0
    %732 = vmatprep.subr.bf16.mxu0 0
    %733 = vmatpush1.bf16.msra.mxu0 0
    %734 = vmatprep.subr.bf16.mxu0 0
    %735 = vmatpush1.bf16.msra.mxu0 0
    %736 = vmatprep.subr.bf16.mxu0 0
    %737 = vmatpush1.bf16.msra.mxu0 0
    %738 = vmatprep.subr.bf16.mxu0 0
    %739 = vmatpush1.bf16.msra.mxu0 0
    %740 = vmatprep.subr.bf16.mxu0 0
    %741 = vmatpush1.bf16.msra.mxu0 0
    %742 = vmatprep.subr.bf16.mxu0 0
    %743 = vmatpush1.bf16.msra.mxu0 0
    %744 = vmatprep.subr.bf16.mxu0 0
    %745 = vmatpush1.bf16.msra.mxu0 0
    %746 = vmatprep.subr.bf16.mxu0 0
    %747 = vmatpush1.bf16.msra.mxu0 0
    %748 = vmatprep.subr.bf16.mxu0 0
    %749 = vmatpush1.bf16.msra.mxu0 0
    %750 = vmatprep.subr.bf16.mxu0 0
    %751 = vmatpush1.bf16.msra.mxu0 0
    %752 = vmatprep.mubr.bf16.mxu0 0
    %753 = vmatmul.mubr.bf16.gmra.mrb[0].mxu0 %v678
    %v754 = vpop.f32.mrb[0].mxu0
    %v755 = vadd.f32 %v715, %v754
    %v756 = vpop.f32.mrb[0].mxu0
    %v757 = vpop.f32.mrb[0].mxu0
    %v758 = vpop.f32.mrb[0].mxu0
    %759 = vdwg.mxu0
    %761 = vrot.lane.b32.xlu0 %v755, 96
    %v762 = vpop.permute.xlu0 %761
    %vm764 = vcmask 911104
    %765 = vst.msk [vmem:[#allocation2] sm:$0x3] %vm764, %v762
    %v766 = vld [vmem:[%s0] sm:$0x3]
    %767 = vset.pattern.permute.xlu0 14
    %768 = vperm.xlu0 %767, %v766
    %v769 = vpop.permute.xlu0 %768
    %vm770 = vcmp.eq.s32.totalorder %v17, %v769
    %771 = vset.pattern.permute.xlu0 15
    %772 = vperm.xlu0 %771, %v766
    %v773 = vpop.permute.xlu0 %772
    %vm774 = vcmp.eq.s32.totalorder %v17, %v773
    %vm775 = vmor %vm770, %vm774
    %v776 = vsel %vm775, 1, 0
    %v777 = vcvt.s32.f32 %v776
    %v778 = vpack.c.bf16 %v777, %v777
    %v780 = vsel %vm50, %v778, 0
    %782 = vmatprep.subr.bf16.mxu0 0
    %783 = vmatpush1.bf16.msra.mxu0 %v47
    %784 = vmatprep.subr.bf16.mxu0 0
    %785 = vmatpush1.bf16.msra.mxu0 %v56
    %786 = vmatprep.subr.bf16.mxu0 0
    %787 = vmatpush1.bf16.msra.mxu0 0
    %788 = vmatprep.subr.bf16.mxu0 0
    %789 = vmatpush1.bf16.msra.mxu0 0
    %790 = vmatprep.subr.bf16.mxu0 0
    %791 = vmatpush1.bf16.msra.mxu0 0
    %792 = vmatprep.subr.bf16.mxu0 0
    %793 = vmatpush1.bf16.msra.mxu0 0
    %794 = vmatprep.subr.bf16.mxu0 0
    %795 = vmatpush1.bf16.msra.mxu0 0
    %796 = vmatprep.subr.bf16.mxu0 0
    %797 = vmatpush1.bf16.msra.mxu0 0
    %798 = vmatprep.subr.bf16.mxu0 0
    %799 = vmatpush1.bf16.msra.mxu0 0
    %800 = vmatprep.subr.bf16.mxu0 0
    %801 = vmatpush1.bf16.msra.mxu0 0
    %802 = vmatprep.subr.bf16.mxu0 0
    %803 = vmatpush1.bf16.msra.mxu0 0
    %804 = vmatprep.subr.bf16.mxu0 0
    %805 = vmatpush1.bf16.msra.mxu0 0
    %806 = vmatprep.subr.bf16.mxu0 0
    %807 = vmatpush1.bf16.msra.mxu0 0
    %808 = vmatprep.subr.bf16.mxu0 0
    %809 = vmatpush1.bf16.msra.mxu0 0
    %810 = vmatprep.subr.bf16.mxu0 0
    %811 = vmatpush1.bf16.msra.mxu0 0
    %812 = vmatprep.subr.bf16.mxu0 0
    %813 = vmatpush1.bf16.msra.mxu0 0
    %814 = vmatprep.mubr.bf16.mxu0 0
    %815 = vmatmul.mubr.bf16.gmra.mrb[0].mxu0 %v780
    %v816 = vpop.f32.mrb[0].mxu0
    %v817 = vadd.f32 0.0, %v816
    %v818 = vpop.f32.mrb[0].mxu0
    %v819 = vpop.f32.mrb[0].mxu0
    %v820 = vpop.f32.mrb[0].mxu0
    %821 = vdwg.mxu0
    %822 = vmatprep.subr.bf16.mxu0 0
    %823 = vmatpush1.bf16.msra.mxu0 %v106
    %824 = vmatprep.subr.bf16.mxu0 0
    %825 = vmatpush1.bf16.msra.mxu0 %v110
    %826 = vmatprep.subr.bf16.mxu0 0
    %827 = vmatpush1.bf16.msra.mxu0 0
    %828 = vmatprep.subr.bf16.mxu0 0
    %829 = vmatpush1.bf16.msra.mxu0 0
    %830 = vmatprep.subr.bf16.mxu0 0
    %831 = vmatpush1.bf16.msra.mxu0 0
    %832 = vmatprep.subr.bf16.mxu0 0
    %833 = vmatpush1.bf16.msra.mxu0 0
    %834 = vmatprep.subr.bf16.mxu0 0
    %835 = vmatpush1.bf16.msra.mxu0 0
    %836 = vmatprep.subr.bf16.mxu0 0
    %837 = vmatpush1.bf16.msra.mxu0 0
    %838 = vmatprep.subr.bf16.mxu0 0
    %839 = vmatpush1.bf16.msra.mxu0 0
    %840 = vmatprep.subr.bf16.mxu0 0
    %841 = vmatpush1.bf16.msra.mxu0 0
    %842 = vmatprep.subr.bf16.mxu0 0
    %843 = vmatpush1.bf16.msra.mxu0 0
    %844 = vmatprep.subr.bf16.mxu0 0
    %845 = vmatpush1.bf16.msra.mxu0 0
    %846 = vmatprep.subr.bf16.mxu0 0
    %847 = vmatpush1.bf16.msra.mxu0 0
    %848 = vmatprep.subr.bf16.mxu0 0
    %849 = vmatpush1.bf16.msra.mxu0 0
    %850 = vmatprep.subr.bf16.mxu0 0
    %851 = vmatpush1.bf16.msra.mxu0 0
    %852 = vmatprep.subr.bf16.mxu0 0
    %853 = vmatpush1.bf16.msra.mxu0 0
    %854 = vmatprep.mubr.bf16.mxu0 0
    %855 = vmatmul.mubr.bf16.gmra.mrb[0].mxu0 %v780
    %v856 = vpop.f32.mrb[0].mxu0
    %v857 = vadd.f32 %v817, %v856
    %v858 = vpop.f32.mrb[0].mxu0
    %v859 = vpop.f32.mrb[0].mxu0
    %v860 = vpop.f32.mrb[0].mxu0
    %861 = vdwg.mxu0
    %863 = vrot.lane.b32.xlu0 %v857, 112
    %v864 = vpop.permute.xlu0 %863
    %vm866 = vcmask 1042304
    %867 = vst.msk [vmem:[#allocation2] sm:$0x3] %vm866, %v864
    // Predicated region
    $region14: #{tpu_custom_call.1} parent=1 // pred_check
      _
    $region15: #{tpu_custom_call.1} parent=1 // pred_check_branch
      %869 = sbr.rel (0) target = $region17
    $region16: #{tpu_custom_call.1} parent=1 // pred_region
      %s871 = ssub.s32 32, 32
      %872 = vsyncadd [#allocation3], %s871
      %s874 = sshll.u32 [#allocation2], 4
      %s875 = int_to_ptr.vmem [resolvable:$true] %s874
      %877 = dma.vmem_to_hbm [thread:$0]  %s875, 32, %s3, [#allocation3]
    $region17: #{tpu_custom_call.1} parent=1 // pred_fallthru
      _
    // Predicated region
    $region18: #{tpu_custom_call.1} parent=1 // pred_check
      _
    $region19: #{tpu_custom_call.1} parent=1 // pred_check_branch
      %879 = sbr.rel (0) target = $region21
    $region20: #{tpu_custom_call.1} parent=1 // pred_region
      %880 = dma.done [#allocation3], 32
    $region21: #{tpu_custom_call.1} parent=1 // pred_fallthru
      _
    %881 = vsyncpa [#allocation3], 1

</llo_original>
